<compile_context>
chip_gen: v6e
topology: v6e:2x2x1
jax: 0.10.0
libtpu: 0.0.40
codegen_flags: <defaults>
</compile_context>

<pallas_src>
import jax
import jax.numpy as jnp
from jax import lax
from jax.experimental import pallas as pl
from jax.experimental.pallas import tpu as pltpu

# ---- model hyper-parameters (from the PyTorch spec) -------------------------
N_EMBD = 32
BLOCK_SIZE = 8
NUM_HEADS = 4
HEAD_SIZE = N_EMBD // NUM_HEADS          # 8
HIDDEN = 4 * N_EMBD                      # 128
VOCAB_SIZE = 65                          # tiny-shakespeare charset size
V_PAD = 128                              # vocab padded to a full lane width


# ---- fused forward kernel ----------------------------------------------------
def bigram_lm_kernel(idx_ref, tok_tab_ref, pos_ref,
                     wqkv_ref, w1_ref, b1_ref,
                     wout_ref, bout_ref,
                     logits_ref):
    TB, T = idx_ref.shape                 # batch tile, sequence length
    VP, C = tok_tab_ref.shape             # padded vocab (128), embedding dim (32)
    nh, hs = NUM_HEADS, C // NUM_HEADS
    M = TB * T
    scale = 1.0 / (C ** 0.5)              # PyTorch v4 scales by n_embd**-0.5 (NOT head_size)
    neg = jnp.float32(-1e30)
    bf16, f32 = jnp.bfloat16, jnp.float32

    # --- token embedding: bf16 one-hot(idx) @ padded table (K=128 MXU pass) ---
    idx = idx_ref[...]                                            # (TB, T) int32
    iota_v = lax.broadcasted_iota(jnp.int32, (TB, T, VP), 2)
    onehot = (idx[:, :, None] == iota_v).astype(bf16)             # (TB, T, VP) bf16
    tok_emb = jnp.dot(onehot.reshape(M, VP), tok_tab_ref[...],
                      preferred_element_type=f32)                 # (M, C) f32
    # + positional embedding (f32 elementwise add on the VPU)
    x = tok_emb.reshape(TB, T, C) + pos_ref[...][None, :, :]      # (TB, T, C) f32

    # --- fused QKV projection: one (M, C) @ (C, 3C) matmul ---
    x_bf = x.reshape(M, C).astype(bf16)
    qkv = jnp.dot(x_bf, wqkv_ref[...], preferred_element_type=f32)  # (M, 3C) f32

    # --- multi-head causal self-attention (static 4-head unroll) ---
    row = lax.broadcasted_iota(jnp.int32, (T, T), 0)
    col = lax.broadcasted_iota(jnp.int32, (T, T), 1)
    causal = (col <= row)[None, :, :]                             # (1, T, T)

    head_outs = []
    for h in range(nh):
        q_h = qkv[:, h * hs:(h + 1) * hs].reshape(TB, T, hs).astype(bf16)
        k_h = qkv[:, C + h * hs:C + (h + 1) * hs].reshape(TB, T, hs).astype(bf16)
        v_h = qkv[:, 2 * C + h * hs:2 * C + (h + 1) * hs].reshape(TB, T, hs).astype(bf16)
        s = jnp.einsum('bqd,bkd->bqk', q_h, k_h,
                       preferred_element_type=f32) * scale        # (TB, T, T)
        s = jnp.where(causal, s, neg)
        s = s - jnp.max(s, axis=-1, keepdims=True)
        p = jnp.exp(s)                                            # EUP, f32
        p = p * pl.reciprocal(jnp.sum(p, axis=-1, keepdims=True), approx=True)
        o_h = jnp.einsum('bqk,bkd->bqd', p.astype(bf16), v_h,
                         preferred_element_type=f32)              # (TB, T, hs)
        head_outs.append(o_h)
    attn = jnp.concatenate(head_outs, axis=-1).reshape(M, C)      # (M, C)

    # --- feed-forward first linear + ReLU ---
    hdn = jnp.dot(attn.astype(bf16), w1_ref[...],
                  preferred_element_type=f32) + b1_ref[...]       # (M, HIDDEN)
    hdn = jnp.maximum(hdn, 0.0)

    # --- fused (FFN second linear o lm_head): (M,128)@(128,128), lane-dense ---
    logits = jnp.dot(hdn.astype(bf16), wout_ref[...],
                     preferred_element_type=f32) + bout_ref[...]  # (M, V_PAD)
    logits_ref[...] = logits.reshape(TB, T, VP).astype(logits_ref.dtype)


# ---- wrapper -----------------------------------------------------------------
def _pick_batch_tile(B, T, target_rows=4096):
    """Batch tile TB: multiple of 8 (or the full batch), TB*T <= ~target_rows
    (safe for v7x's 64 MiB VMEM), and >= 2 grid steps whenever the batch allows
    (v7x megacore / pipelining).  Never falls back to one giant un-tiled batch."""
    if B <= 8:
        return B                                        # block dim == full array dim
    cap = max(8, (target_rows // T) // 8 * 8)           # VMEM-friendly row budget
    half = max(8, (B // 2) // 8 * 8)                    # ensure >= 2 grid steps
    return min(cap, half)


def _prepare_kernel_params(params, T):
    """Build the kernel-ready (fused / padded / bf16) weights in the wrapper."""
    C, H, V, VP = N_EMBD, HIDDEN, VOCAB_SIZE, V_PAD
    f32, bf16 = jnp.float32, jnp.bfloat16
    tok_tab = jnp.zeros((VP, C), f32).at[:V].set(params["tok_table"]).astype(bf16)
    pos_emb = params["pos_table"][:T].astype(f32)                  # arange(T) lookup == slice
    wqkv = jnp.concatenate([params["wq"], params["wk"], params["wv"]],
                           axis=1).astype(bf16)                    # (C, 3C)
    w1 = params["w1"].astype(bf16)                                 # (C, H)
    b1 = params["b1"].reshape(1, H).astype(f32)
    # Algebraic fusion of FFN second linear with lm_head (exact, done in f32).
    w_out_f32 = params["w2"] @ params["wlm"]                       # (H, V)
    b_out_f32 = params["b2"] @ params["wlm"] + params["blm"]       # (V,)
    w_out = jnp.zeros((H, VP), f32).at[:, :V].set(w_out_f32).astype(bf16)
    b_out = jnp.zeros((1, VP), f32).at[0, :V].set(b_out_f32)
    return tok_tab, pos_emb, wqkv, w1, b1, w_out, b_out


def _cross_entropy(logits, targets):
    # Plain JAX (outside the Pallas kernel) — mirrors F.cross_entropy.
    V = logits.shape[-1]
    lg = logits.reshape(-1, V)
    tg = targets.reshape(-1)
    logz = jax.nn.logsumexp(lg, axis=-1)
    gold = jnp.take_along_axis(lg, tg[:, None], axis=-1)[:, 0]
    return jnp.mean(logz - gold)


def bigram_lm_forward(idx, params, targets=None):
    """idx: (B, T) int32 tokens -> (logits (B, T, V) f32, loss or None)."""
    B, T = idx.shape
    C, H, V, VP = N_EMBD, HIDDEN, VOCAB_SIZE, V_PAD
    f32 = jnp.float32

    TB = _pick_batch_tile(B, T)
    nb = pl.cdiv(B, TB)

    kargs = _prepare_kernel_params(params, T)

    M = B * T
    weight_bytes = sum(int(a.size) * a.dtype.itemsize for a in kargs)
    cost = pl.CostEstimate(
        flops=int(2 * M * VP * C          # embedding one-hot matmul
                  + 2 * M * C * (3 * C)   # fused QKV
                  + 4 * M * T * C         # attention scores + output
                  + 2 * M * C * H         # FFN first linear
                  + 2 * M * H * VP),      # fused FFN2 o lm_head
        transcendentals=int(B * NUM_HEADS * T * T),
        bytes_accessed=int(idx.size * 4 + weight_bytes + M * VP * 4),  # weights resident: once
    )

    const2 = lambda i: (0, 0)
    logits_pad = pl.pallas_call(
        bigram_lm_kernel,
        out_shape=jax.ShapeDtypeStruct((B, T, VP), f32),
        grid_spec=pltpu.PrefetchScalarGridSpec(
            num_scalar_prefetch=0,
            grid=(nb,),
            in_specs=[
                pl.BlockSpec((TB, T), lambda i: (i, 0)),   # idx (streamed per tile)
                pl.BlockSpec((VP, C), const2),             # padded token table
                pl.BlockSpec((T, C), const2),              # positional embeddings
                pl.BlockSpec((C, 3 * C), const2),          # fused Wqkv
                pl.BlockSpec((C, H), const2),              # FFN W1
                pl.BlockSpec((1, H), const2),              # FFN b1
                pl.BlockSpec((H, VP), const2),             # fused W2@Wlm (padded)
                pl.BlockSpec((1, VP), const2),             # fused bias (padded)
            ],
            out_specs=pl.BlockSpec((TB, T, VP), lambda i: (i, 0, 0)),
        ),
        compiler_params=pltpu.CompilerParams(
            dimension_semantics=("parallel",),   # batch tiles independent -> 2x TC on v7x
        ),
        cost_estimate=cost,
    )(idx.astype(jnp.int32), *kargs)

    logits = logits_pad[..., :V]            # drop the zero lane padding

    loss = None
    if targets is not None:
        loss = _cross_entropy(logits, targets)   # TODO(synk): not a Pallas kernel
    return logits, loss


# ---- pure-JAX references -----------------------------------------------------
def reference_kernel_math(idx, params):
    """Mirror of the kernel's fused/bf16 math in plain JAX (exact softmax recip)."""
    B, T = idx.shape
    C, H, V, VP = N_EMBD, HIDDEN, VOCAB_SIZE, V_PAD
    nh, hs = NUM_HEADS, HEAD_SIZE
    f32, bf16 = jnp.float32, jnp.bfloat16
    tok_tab, pos_emb, wqkv, w1, b1, w_out, b_out = _prepare_kernel_params(params, T)
    M = B * T

    onehot = (idx[:, :, None] == jnp.arange(VP)[None, None, :]).astype(bf16)
    tok = jnp.dot(onehot.reshape(M, VP), tok_tab, preferred_element_type=f32)
    x = tok.reshape(B, T, C) + pos_emb[None]
    x_bf = x.reshape(M, C).astype(bf16)
    qkv = jnp.dot(x_bf, wqkv, preferred_element_type=f32)

    causal = jnp.tril(jnp.ones((T, T), bool))[None]
    scale = 1.0 / (C ** 0.5)
    outs = []
    for h in range(nh):
        q_h = qkv[:, h * hs:(h + 1) * hs].reshape(B, T, hs).astype(bf16)
        k_h = qkv[:, C + h * hs:C + (h + 1) * hs].reshape(B, T, hs).astype(bf16)
        v_h = qkv[:, 2 * C + h * hs:2 * C + (h + 1) * hs].reshape(B, T, hs).astype(bf16)
        s = jnp.einsum('bqd,bkd->bqk', q_h, k_h, preferred_element_type=f32) * scale
        s = jnp.where(causal, s, jnp.float32(-1e30))
        s = s - jnp.max(s, axis=-1, keepdims=True)
        p = jnp.exp(s)
        p = p / jnp.sum(p, axis=-1, keepdims=True)
        outs.append(jnp.einsum('bqk,bkd->bqd', p.astype(bf16), v_h,
                               preferred_element_type=f32))
    attn = jnp.concatenate(outs, axis=-1).reshape(M, C)

    hdn = jnp.maximum(jnp.dot(attn.astype(bf16), w1, preferred_element_type=f32) + b1, 0.0)
    logits = jnp.dot(hdn.astype(bf16), w_out, preferred_element_type=f32) + b_out
    return logits.reshape(B, T, VP)[..., :V]


def reference_forward_f32(idx, params):
    """Full-precision, PyTorch-equivalent (unfused) forward pass."""
    B, T = idx.shape
    C, H, V = N_EMBD, HIDDEN, VOCAB_SIZE
    nh, hs = NUM_HEADS, HEAD_SIZE

    tok = jnp.take(params["tok_table"], idx, axis=0)
    x = tok + params["pos_table"][:T][None]
    x2 = x.reshape(B * T, C)
    q = (x2 @ params["wq"]).reshape(B, T, nh, hs)
    k = (x2 @ params["wk"]).reshape(B, T, nh, hs)
    v = (x2 @ params["wv"]).reshape(B, T, nh, hs)
    s = jnp.einsum('bqhd,bkhd->bhqk', q, k) * (1.0 / (C ** 0.5))
    causal = jnp.tril(jnp.ones((T, T), bool))[None, None]
    s = jnp.where(causal, s, -jnp.inf)
    p = jax.nn.softmax(s, axis=-1)
    o = jnp.einsum('bhqk,bkhd->bqhd', p, v)
    attn = o.reshape(B * T, C)
    hdn = jnp.maximum(attn @ params["w1"] + params["b1"], 0.0)
    y = hdn @ params["w2"] + params["b2"]
    logits = y @ params["wlm"] + params["blm"]
    return logits.reshape(B, T, V)


# ---- parameter init (mirrors nn.Embedding N(0,1) and nn.Linear U(+-1/sqrt(fan_in))) ----
def init_params(key):
    ks = jax.random.split(key, 11)
    C, H, V, BS = N_EMBD, HIDDEN, VOCAB_SIZE, BLOCK_SIZE
    u = lambda k, shape, b: jax.random.uniform(k, shape, jnp.float32, -b, b)
    b_c = 1.0 / (C ** 0.5)
    b_h = 1.0 / (H ** 0.5)
    return dict(
        tok_table=jax.random.normal(ks[0], (V, C), jnp.float32),
        pos_table=jax.random.normal(ks[1], (BS, C), jnp.float32),
        wq=u(ks[2], (C, C), b_c),      # 4 heads stacked along output columns
        wk=u(ks[3], (C, C), b_c),
        wv=u(ks[4], (C, C), b_c),
        w1=u(ks[5], (C, H), b_c), b1=u(ks[6], (H,), b_c),
        w2=u(ks[7], (H, C), b_h), b2=u(ks[8], (C,), b_h),
        wlm=u(ks[9], (C, V), b_c), blm=u(ks[10], (V,), b_c),
    )


if __name__ == "__main__":
    key = jax.random.PRNGKey(0)
    k_idx, k_tgt, k_par = jax.random.split(key, 3)

    B, T = 2, BLOCK_SIZE
    idx = jax.random.randint(k_idx, (B, T), 0, VOCAB_SIZE, dtype=jnp.int32)
    targets = jax.random.randint(k_tgt, (B, T), 0, VOCAB_SIZE, dtype=jnp.int32)
    params = init_params(k_par)

    logits, loss = bigram_lm_forward(idx, params, targets=targets)
    logits = jax.block_until_ready(logits)

    # Tight check vs. a reference mirroring the kernel's fused/bf16 math
    # (only deviation: exact divide vs. EUP approx reciprocal in softmax).
    ref_kernel = reference_kernel_math(idx, params)
    # Loose sanity check vs. full-f32 (PyTorch-exact, unfused) semantics.
    ref_f32 = reference_forward_f32(idx, params)

    assert logits.shape == (B, T, VOCAB_SIZE)
    assert jnp.allclose(logits, ref_kernel, atol=2e-2, rtol=2e-2)
    assert jnp.allclose(logits, ref_f32, atol=1.5e-1, rtol=1.5e-1)
    assert bool(jnp.isfinite(loss))

    print("KERNEL_OK")
</pallas_src>

<mosaic_0001>
module attributes {stable_mosaic.version = 11 : i64} {
  func.func @bigram_lm_kernel(%arg0: i32, %arg1: memref<2x8xi32, #tpu.memory_space<vmem>>, %arg2: memref<128x32xbf16, #tpu.memory_space<vmem>>, %arg3: memref<8x32xf32, #tpu.memory_space<vmem>>, %arg4: memref<32x96xbf16, #tpu.memory_space<vmem>>, %arg5: memref<32x128xbf16, #tpu.memory_space<vmem>>, %arg6: memref<1x128xf32, #tpu.memory_space<vmem>>, %arg7: memref<128x128xbf16, #tpu.memory_space<vmem>>, %arg8: memref<1x128xf32, #tpu.memory_space<vmem>>, %arg9: memref<2x8x128xf32, #tpu.memory_space<vmem>>) attributes {dimension_semantics = [#tpu.dimension_semantics<parallel>], iteration_bounds = array<i64: 1>, scalar_prefetch = 0 : i64, scratch_operands = 0 : i64, tpu.core_type = #tpu.core_type<tc>, window_params = [{transform_indices = @transform_0, window_bounds = array<i64: 2, 8>}, {pipeline_mode = #tpu.pipeline_mode<synchronous>, transform_indices = @transform_1, window_bounds = array<i64: 128, 32>}, {pipeline_mode = #tpu.pipeline_mode<synchronous>, transform_indices = @transform_2, window_bounds = array<i64: 8, 32>}, {pipeline_mode = #tpu.pipeline_mode<synchronous>, transform_indices = @transform_3, window_bounds = array<i64: 32, 96>}, {pipeline_mode = #tpu.pipeline_mode<synchronous>, transform_indices = @transform_4, window_bounds = array<i64: 32, 128>}, {pipeline_mode = #tpu.pipeline_mode<synchronous>, transform_indices = @transform_5, window_bounds = array<i64: 1, 128>}, {pipeline_mode = #tpu.pipeline_mode<synchronous>, transform_indices = @transform_6, window_bounds = array<i64: 128, 128>}, {pipeline_mode = #tpu.pipeline_mode<synchronous>, transform_indices = @transform_7, window_bounds = array<i64: 1, 128>}, {transform_indices = @transform_8, window_bounds = array<i64: 2, 8, 128>}]} {
    %c0 = arith.constant 0 : index
    %c0_0 = arith.constant 0 : index
    %0 = vector.load %arg1[%c0, %c0_0] : memref<2x8xi32, #tpu.memory_space<vmem>>, vector<2x8xi32>
    %1 = tpu.iota {dimensions = array<i32: 2>} : vector<2x8x128xi32>
    %2 = vector.shape_cast %0 : vector<2x8xi32> to vector<2x8x1xi32>
    %3 = vector.broadcast %2 : vector<2x8x1xi32> to vector<2x8x128xi32>
    %4 = arith.cmpi eq, %3, %1 : vector<2x8x128xi32>
    %5 = arith.extui %4 : vector<2x8x128xi1> to vector<2x8x128xi32>
    %6 = arith.sitofp %5 : vector<2x8x128xi32> to vector<2x8x128xf32>
    %7 = arith.truncf %6 : vector<2x8x128xf32> to vector<2x8x128xbf16>
    %8 = vector.shape_cast %7 : vector<2x8x128xbf16> to vector<16x128xbf16>
    %c0_1 = arith.constant 0 : index
    %c0_2 = arith.constant 0 : index
    %9 = vector.load %arg2[%c0_1, %c0_2] : memref<128x32xbf16, #tpu.memory_space<vmem>>, vector<128x32xbf16>
    %cst = arith.constant dense<0.000000e+00> : vector<16x32xf32>
    %10 = tpu.matmul %8, %9, %cst {dimension_numbers = #tpu.dot_dimension_numbers<[1], [0], [0], [1], [0, 0, 1, 1], [], []>} : vector<16x128xbf16>, vector<128x32xbf16>, vector<16x32xf32> -> vector<16x32xf32>
    %11 = vector.shape_cast %10 : vector<16x32xf32> to vector<2x8x32xf32>
    %c0_3 = arith.constant 0 : index
    %c0_4 = arith.constant 0 : index
    %12 = vector.load %arg3[%c0_3, %c0_4] : memref<8x32xf32, #tpu.memory_space<vmem>>, vector<8x32xf32>
    %13 = vector.shape_cast %12 : vector<8x32xf32> to vector<1x8x32xf32>
    %14 = vector.broadcast %13 : vector<1x8x32xf32> to vector<2x8x32xf32>
    %15 = arith.addf %11, %14 : vector<2x8x32xf32>
    %16 = vector.shape_cast %15 : vector<2x8x32xf32> to vector<16x32xf32>
    %17 = arith.truncf %16 : vector<16x32xf32> to vector<16x32xbf16>
    %c0_5 = arith.constant 0 : index
    %c0_6 = arith.constant 0 : index
    %18 = vector.load %arg4[%c0_5, %c0_6] : memref<32x96xbf16, #tpu.memory_space<vmem>>, vector<32x96xbf16>
    %cst_7 = arith.constant dense<0.000000e+00> : vector<16x96xf32>
    %19 = tpu.matmul %17, %18, %cst_7 {dimension_numbers = #tpu.dot_dimension_numbers<[1], [0], [0], [1], [0, 0, 1, 1], [], []>} : vector<16x32xbf16>, vector<32x96xbf16>, vector<16x96xf32> -> vector<16x96xf32>
    %20 = tpu.iota {dimensions = array<i32: 0>} : vector<8x8xi32>
    %21 = tpu.iota {dimensions = array<i32: 1>} : vector<8x8xi32>
    %22 = arith.cmpi sle, %21, %20 : vector<8x8xi32>
    %23 = vector.shape_cast %22 : vector<8x8xi1> to vector<1x8x8xi1>
    %24 = vector.extract_strided_slice %19 {offsets = [0, 0], sizes = [16, 8], strides = [1, 1]} : vector<16x96xf32> to vector<16x8xf32>
    %25 = vector.shape_cast %24 : vector<16x8xf32> to vector<2x8x8xf32>
    %26 = arith.truncf %25 : vector<2x8x8xf32> to vector<2x8x8xbf16>
    %27 = vector.extract_strided_slice %19 {offsets = [0, 32], sizes = [16, 8], strides = [1, 1]} : vector<16x96xf32> to vector<16x8xf32>
    %28 = vector.shape_cast %27 : vector<16x8xf32> to vector<2x8x8xf32>
    %29 = arith.truncf %28 : vector<2x8x8xf32> to vector<2x8x8xbf16>
    %30 = vector.extract_strided_slice %19 {offsets = [0, 64], sizes = [16, 8], strides = [1, 1]} : vector<16x96xf32> to vector<16x8xf32>
    %31 = vector.shape_cast %30 : vector<16x8xf32> to vector<2x8x8xf32>
    %32 = arith.truncf %31 : vector<2x8x8xf32> to vector<2x8x8xbf16>
    "tpu.trace_start"() <{level = 10 : i32, message = "bqd,bkd->bqk"}> : () -> ()
    %cst_8 = arith.constant dense<0.000000e+00> : vector<2x8x8xf32>
    %33 = tpu.matmul %26, %29, %cst_8 {dimension_numbers = #tpu.dot_dimension_numbers<[2], [2], [1], [1], [0, 0, 0, 1, 1, 1], [0], [0]>} : vector<2x8x8xbf16>, vector<2x8x8xbf16>, vector<2x8x8xf32> -> vector<2x8x8xf32>
    "tpu.trace_stop"() : () -> ()
    %cst_9 = arith.constant 0.176776692 : f32
    %34 = vector.broadcast %cst_9 : f32 to vector<2x8x8xf32>
    %35 = arith.mulf %33, %34 : vector<2x8x8xf32>
    %cst_10 = arith.constant -1.000000e+30 : f32
    %36 = vector.shape_cast %23 : vector<1x8x8xi1> to vector<1x8x8xi1>
    %37 = vector.broadcast %36 : vector<1x8x8xi1> to vector<2x8x8xi1>
    %38 = vector.broadcast %cst_10 : f32 to vector<2x8x8xf32>
    %39 = arith.select %37, %35, %38 : vector<2x8x8xi1>, vector<2x8x8xf32>
    %cst_11 = arith.constant dense<0xFF800000> : vector<2x8xf32>
    %40 = vector.multi_reduction <maximumf>, %39, %cst_11 [2] : vector<2x8x8xf32> to vector<2x8xf32>
    %41 = vector.shape_cast %40 : vector<2x8xf32> to vector<2x8x1xf32>
    %42 = vector.broadcast %41 : vector<2x8x1xf32> to vector<2x8x8xf32>
    %43 = arith.subf %39, %42 : vector<2x8x8xf32>
    %44 = math.exp %43 : vector<2x8x8xf32>
    %cst_12 = arith.constant dense<0.000000e+00> : vector<2x8xf32>
    %45 = vector.multi_reduction <add>, %44, %cst_12 [2] : vector<2x8x8xf32> to vector<2x8xf32>
    %46 = vector.shape_cast %45 : vector<2x8xf32> to vector<2x8x1xf32>
    %47 = tpu.reciprocal %46 {approx = true} : vector<2x8x1xf32> -> vector<2x8x1xf32>
    %48 = vector.broadcast %47 : vector<2x8x1xf32> to vector<2x8x8xf32>
    %49 = arith.mulf %44, %48 : vector<2x8x8xf32>
    %50 = arith.truncf %49 : vector<2x8x8xf32> to vector<2x8x8xbf16>
    "tpu.trace_start"() <{level = 10 : i32, message = "bqk,bkd->bqd"}> : () -> ()
    %cst_13 = arith.constant dense<0.000000e+00> : vector<2x8x8xf32>
    %51 = tpu.matmul %50, %32, %cst_13 {dimension_numbers = #tpu.dot_dimension_numbers<[2], [1], [1], [2], [0, 0, 0, 1, 1, 2], [0], [0]>} : vector<2x8x8xbf16>, vector<2x8x8xbf16>, vector<2x8x8xf32> -> vector<2x8x8xf32>
    "tpu.trace_stop"() : () -> ()
    %52 = vector.extract_strided_slice %19 {offsets = [0, 8], sizes = [16, 8], strides = [1, 1]} : vector<16x96xf32> to vector<16x8xf32>
    %53 = vector.shape_cast %52 : vector<16x8xf32> to vector<2x8x8xf32>
    %54 = arith.truncf %53 : vector<2x8x8xf32> to vector<2x8x8xbf16>
    %55 = vector.extract_strided_slice %19 {offsets = [0, 40], sizes = [16, 8], strides = [1, 1]} : vector<16x96xf32> to vector<16x8xf32>
    %56 = vector.shape_cast %55 : vector<16x8xf32> to vector<2x8x8xf32>
    %57 = arith.truncf %56 : vector<2x8x8xf32> to vector<2x8x8xbf16>
    %58 = vector.extract_strided_slice %19 {offsets = [0, 72], sizes = [16, 8], strides = [1, 1]} : vector<16x96xf32> to vector<16x8xf32>
    %59 = vector.shape_cast %58 : vector<16x8xf32> to vector<2x8x8xf32>
    %60 = arith.truncf %59 : vector<2x8x8xf32> to vector<2x8x8xbf16>
    "tpu.trace_start"() <{level = 10 : i32, message = "bqd,bkd->bqk"}> : () -> ()
    %cst_14 = arith.constant dense<0.000000e+00> : vector<2x8x8xf32>
    %61 = tpu.matmul %54, %57, %cst_14 {dimension_numbers = #tpu.dot_dimension_numbers<[2], [2], [1], [1], [0, 0, 0, 1, 1, 1], [0], [0]>} : vector<2x8x8xbf16>, vector<2x8x8xbf16>, vector<2x8x8xf32> -> vector<2x8x8xf32>
    "tpu.trace_stop"() : () -> ()
    %cst_15 = arith.constant 0.176776692 : f32
    %62 = vector.broadcast %cst_15 : f32 to vector<2x8x8xf32>
    %63 = arith.mulf %61, %62 : vector<2x8x8xf32>
    %cst_16 = arith.constant -1.000000e+30 : f32
    %64 = vector.shape_cast %23 : vector<1x8x8xi1> to vector<1x8x8xi1>
    %65 = vector.broadcast %64 : vector<1x8x8xi1> to vector<2x8x8xi1>
    %66 = vector.broadcast %cst_16 : f32 to vector<2x8x8xf32>
    %67 = arith.select %65, %63, %66 : vector<2x8x8xi1>, vector<2x8x8xf32>
    %cst_17 = arith.constant dense<0xFF800000> : vector<2x8xf32>
    %68 = vector.multi_reduction <maximumf>, %67, %cst_17 [2] : vector<2x8x8xf32> to vector<2x8xf32>
    %69 = vector.shape_cast %68 : vector<2x8xf32> to vector<2x8x1xf32>
    %70 = vector.broadcast %69 : vector<2x8x1xf32> to vector<2x8x8xf32>
    %71 = arith.subf %67, %70 : vector<2x8x8xf32>
    %72 = math.exp %71 : vector<2x8x8xf32>
    %cst_18 = arith.constant dense<0.000000e+00> : vector<2x8xf32>
    %73 = vector.multi_reduction <add>, %72, %cst_18 [2] : vector<2x8x8xf32> to vector<2x8xf32>
    %74 = vector.shape_cast %73 : vector<2x8xf32> to vector<2x8x1xf32>
    %75 = tpu.reciprocal %74 {approx = true} : vector<2x8x1xf32> -> vector<2x8x1xf32>
    %76 = vector.broadcast %75 : vector<2x8x1xf32> to vector<2x8x8xf32>
    %77 = arith.mulf %72, %76 : vector<2x8x8xf32>
    %78 = arith.truncf %77 : vector<2x8x8xf32> to vector<2x8x8xbf16>
    "tpu.trace_start"() <{level = 10 : i32, message = "bqk,bkd->bqd"}> : () -> ()
    %cst_19 = arith.constant dense<0.000000e+00> : vector<2x8x8xf32>
    %79 = tpu.matmul %78, %60, %cst_19 {dimension_numbers = #tpu.dot_dimension_numbers<[2], [1], [1], [2], [0, 0, 0, 1, 1, 2], [0], [0]>} : vector<2x8x8xbf16>, vector<2x8x8xbf16>, vector<2x8x8xf32> -> vector<2x8x8xf32>
    "tpu.trace_stop"() : () -> ()
    %80 = vector.extract_strided_slice %19 {offsets = [0, 16], sizes = [16, 8], strides = [1, 1]} : vector<16x96xf32> to vector<16x8xf32>
    %81 = vector.shape_cast %80 : vector<16x8xf32> to vector<2x8x8xf32>
    %82 = arith.truncf %81 : vector<2x8x8xf32> to vector<2x8x8xbf16>
    %83 = vector.extract_strided_slice %19 {offsets = [0, 48], sizes = [16, 8], strides = [1, 1]} : vector<16x96xf32> to vector<16x8xf32>
    %84 = vector.shape_cast %83 : vector<16x8xf32> to vector<2x8x8xf32>
    %85 = arith.truncf %84 : vector<2x8x8xf32> to vector<2x8x8xbf16>
    %86 = vector.extract_strided_slice %19 {offsets = [0, 80], sizes = [16, 8], strides = [1, 1]} : vector<16x96xf32> to vector<16x8xf32>
    %87 = vector.shape_cast %86 : vector<16x8xf32> to vector<2x8x8xf32>
    %88 = arith.truncf %87 : vector<2x8x8xf32> to vector<2x8x8xbf16>
    "tpu.trace_start"() <{level = 10 : i32, message = "bqd,bkd->bqk"}> : () -> ()
    %cst_20 = arith.constant dense<0.000000e+00> : vector<2x8x8xf32>
    %89 = tpu.matmul %82, %85, %cst_20 {dimension_numbers = #tpu.dot_dimension_numbers<[2], [2], [1], [1], [0, 0, 0, 1, 1, 1], [0], [0]>} : vector<2x8x8xbf16>, vector<2x8x8xbf16>, vector<2x8x8xf32> -> vector<2x8x8xf32>
    "tpu.trace_stop"() : () -> ()
    %cst_21 = arith.constant 0.176776692 : f32
    %90 = vector.broadcast %cst_21 : f32 to vector<2x8x8xf32>
    %91 = arith.mulf %89, %90 : vector<2x8x8xf32>
    %cst_22 = arith.constant -1.000000e+30 : f32
    %92 = vector.shape_cast %23 : vector<1x8x8xi1> to vector<1x8x8xi1>
    %93 = vector.broadcast %92 : vector<1x8x8xi1> to vector<2x8x8xi1>
    %94 = vector.broadcast %cst_22 : f32 to vector<2x8x8xf32>
    %95 = arith.select %93, %91, %94 : vector<2x8x8xi1>, vector<2x8x8xf32>
    %cst_23 = arith.constant dense<0xFF800000> : vector<2x8xf32>
    %96 = vector.multi_reduction <maximumf>, %95, %cst_23 [2] : vector<2x8x8xf32> to vector<2x8xf32>
    %97 = vector.shape_cast %96 : vector<2x8xf32> to vector<2x8x1xf32>
    %98 = vector.broadcast %97 : vector<2x8x1xf32> to vector<2x8x8xf32>
    %99 = arith.subf %95, %98 : vector<2x8x8xf32>
    %100 = math.exp %99 : vector<2x8x8xf32>
    %cst_24 = arith.constant dense<0.000000e+00> : vector<2x8xf32>
    %101 = vector.multi_reduction <add>, %100, %cst_24 [2] : vector<2x8x8xf32> to vector<2x8xf32>
    %102 = vector.shape_cast %101 : vector<2x8xf32> to vector<2x8x1xf32>
    %103 = tpu.reciprocal %102 {approx = true} : vector<2x8x1xf32> -> vector<2x8x1xf32>
    %104 = vector.broadcast %103 : vector<2x8x1xf32> to vector<2x8x8xf32>
    %105 = arith.mulf %100, %104 : vector<2x8x8xf32>
    %106 = arith.truncf %105 : vector<2x8x8xf32> to vector<2x8x8xbf16>
    "tpu.trace_start"() <{level = 10 : i32, message = "bqk,bkd->bqd"}> : () -> ()
    %cst_25 = arith.constant dense<0.000000e+00> : vector<2x8x8xf32>
    %107 = tpu.matmul %106, %88, %cst_25 {dimension_numbers = #tpu.dot_dimension_numbers<[2], [1], [1], [2], [0, 0, 0, 1, 1, 2], [0], [0]>} : vector<2x8x8xbf16>, vector<2x8x8xbf16>, vector<2x8x8xf32> -> vector<2x8x8xf32>
    "tpu.trace_stop"() : () -> ()
    %108 = vector.extract_strided_slice %19 {offsets = [0, 24], sizes = [16, 8], strides = [1, 1]} : vector<16x96xf32> to vector<16x8xf32>
    %109 = vector.shape_cast %108 : vector<16x8xf32> to vector<2x8x8xf32>
    %110 = arith.truncf %109 : vector<2x8x8xf32> to vector<2x8x8xbf16>
    %111 = vector.extract_strided_slice %19 {offsets = [0, 56], sizes = [16, 8], strides = [1, 1]} : vector<16x96xf32> to vector<16x8xf32>
    %112 = vector.shape_cast %111 : vector<16x8xf32> to vector<2x8x8xf32>
    %113 = arith.truncf %112 : vector<2x8x8xf32> to vector<2x8x8xbf16>
    %114 = vector.extract_strided_slice %19 {offsets = [0, 88], sizes = [16, 8], strides = [1, 1]} : vector<16x96xf32> to vector<16x8xf32>
    %115 = vector.shape_cast %114 : vector<16x8xf32> to vector<2x8x8xf32>
    %116 = arith.truncf %115 : vector<2x8x8xf32> to vector<2x8x8xbf16>
    "tpu.trace_start"() <{level = 10 : i32, message = "bqd,bkd->bqk"}> : () -> ()
    %cst_26 = arith.constant dense<0.000000e+00> : vector<2x8x8xf32>
    %117 = tpu.matmul %110, %113, %cst_26 {dimension_numbers = #tpu.dot_dimension_numbers<[2], [2], [1], [1], [0, 0, 0, 1, 1, 1], [0], [0]>} : vector<2x8x8xbf16>, vector<2x8x8xbf16>, vector<2x8x8xf32> -> vector<2x8x8xf32>
    "tpu.trace_stop"() : () -> ()
    %cst_27 = arith.constant 0.176776692 : f32
    %118 = vector.broadcast %cst_27 : f32 to vector<2x8x8xf32>
    %119 = arith.mulf %117, %118 : vector<2x8x8xf32>
    %cst_28 = arith.constant -1.000000e+30 : f32
    %120 = vector.shape_cast %23 : vector<1x8x8xi1> to vector<1x8x8xi1>
    %121 = vector.broadcast %120 : vector<1x8x8xi1> to vector<2x8x8xi1>
    %122 = vector.broadcast %cst_28 : f32 to vector<2x8x8xf32>
    %123 = arith.select %121, %119, %122 : vector<2x8x8xi1>, vector<2x8x8xf32>
    %cst_29 = arith.constant dense<0xFF800000> : vector<2x8xf32>
    %124 = vector.multi_reduction <maximumf>, %123, %cst_29 [2] : vector<2x8x8xf32> to vector<2x8xf32>
    %125 = vector.shape_cast %124 : vector<2x8xf32> to vector<2x8x1xf32>
    %126 = vector.broadcast %125 : vector<2x8x1xf32> to vector<2x8x8xf32>
    %127 = arith.subf %123, %126 : vector<2x8x8xf32>
    %128 = math.exp %127 : vector<2x8x8xf32>
    %cst_30 = arith.constant dense<0.000000e+00> : vector<2x8xf32>
    %129 = vector.multi_reduction <add>, %128, %cst_30 [2] : vector<2x8x8xf32> to vector<2x8xf32>
    %130 = vector.shape_cast %129 : vector<2x8xf32> to vector<2x8x1xf32>
    %131 = tpu.reciprocal %130 {approx = true} : vector<2x8x1xf32> -> vector<2x8x1xf32>
    %132 = vector.broadcast %131 : vector<2x8x1xf32> to vector<2x8x8xf32>
    %133 = arith.mulf %128, %132 : vector<2x8x8xf32>
    %134 = arith.truncf %133 : vector<2x8x8xf32> to vector<2x8x8xbf16>
    "tpu.trace_start"() <{level = 10 : i32, message = "bqk,bkd->bqd"}> : () -> ()
    %cst_31 = arith.constant dense<0.000000e+00> : vector<2x8x8xf32>
    %135 = tpu.matmul %134, %116, %cst_31 {dimension_numbers = #tpu.dot_dimension_numbers<[2], [1], [1], [2], [0, 0, 0, 1, 1, 2], [0], [0]>} : vector<2x8x8xbf16>, vector<2x8x8xbf16>, vector<2x8x8xf32> -> vector<2x8x8xf32>
    "tpu.trace_stop"() : () -> ()
    %136 = tpu.concatenate %51, %79, %107, %135 in 2 : vector<2x8x8xf32>, vector<2x8x8xf32>, vector<2x8x8xf32>, vector<2x8x8xf32> -> vector<2x8x32xf32>
    %137 = vector.shape_cast %136 : vector<2x8x32xf32> to vector<16x32xf32>
    %138 = arith.truncf %137 : vector<16x32xf32> to vector<16x32xbf16>
    %c0_32 = arith.constant 0 : index
    %c0_33 = arith.constant 0 : index
    %139 = vector.load %arg5[%c0_32, %c0_33] : memref<32x128xbf16, #tpu.memory_space<vmem>>, vector<32x128xbf16>
    %cst_34 = arith.constant dense<0.000000e+00> : vector<16x128xf32>
    %140 = tpu.matmul %138, %139, %cst_34 {dimension_numbers = #tpu.dot_dimension_numbers<[1], [0], [0], [1], [0, 0, 1, 1], [], []>} : vector<16x32xbf16>, vector<32x128xbf16>, vector<16x128xf32> -> vector<16x128xf32>
    %c0_35 = arith.constant 0 : index
    %c0_36 = arith.constant 0 : index
    %141 = vector.load %arg6[%c0_35, %c0_36] : memref<1x128xf32, #tpu.memory_space<vmem>>, vector<1x128xf32>
    %142 = vector.broadcast %141 : vector<1x128xf32> to vector<16x128xf32>
    %143 = arith.addf %140, %142 : vector<16x128xf32>
    %cst_37 = arith.constant 0.000000e+00 : f32
    %144 = vector.broadcast %cst_37 : f32 to vector<16x128xf32>
    %145 = arith.maximumf %143, %144 : vector<16x128xf32>
    %146 = arith.truncf %145 : vector<16x128xf32> to vector<16x128xbf16>
    %c0_38 = arith.constant 0 : index
    %c0_39 = arith.constant 0 : index
    %147 = vector.load %arg7[%c0_38, %c0_39] : memref<128x128xbf16, #tpu.memory_space<vmem>>, vector<128x128xbf16>
    %cst_40 = arith.constant dense<0.000000e+00> : vector<16x128xf32>
    %148 = tpu.matmul %146, %147, %cst_40 {dimension_numbers = #tpu.dot_dimension_numbers<[1], [0], [0], [1], [0, 0, 1, 1], [], []>} : vector<16x128xbf16>, vector<128x128xbf16>, vector<16x128xf32> -> vector<16x128xf32>
    %c0_41 = arith.constant 0 : index
    %c0_42 = arith.constant 0 : index
    %149 = vector.load %arg8[%c0_41, %c0_42] : memref<1x128xf32, #tpu.memory_space<vmem>>, vector<1x128xf32>
    %150 = vector.broadcast %149 : vector<1x128xf32> to vector<16x128xf32>
    %151 = arith.addf %148, %150 : vector<16x128xf32>
    %152 = vector.shape_cast %151 : vector<16x128xf32> to vector<2x8x128xf32>
    %c0_43 = arith.constant 0 : index
    %c0_44 = arith.constant 0 : index
    %c0_45 = arith.constant 0 : index
    %153 = vector.load %arg9[%c0_43, %c0_44, %c0_45] : memref<2x8x128xf32, #tpu.memory_space<vmem>>, vector<2x8x128xf32>
    tpu.vector_store %arg9[%c0_43, %c0_44, %c0_45], %152 {strides = array<i32>} : memref<2x8x128xf32, #tpu.memory_space<vmem>>, vector<2x8x128xf32>,
    return
  }
  func.func @transform_0(%arg0: i32) -> (i32, i32) {
    %c0_i32 = arith.constant 0 : i32
    %c0_i32_0 = arith.constant 0 : i32
    return %arg0, %c0_i32 : i32, i32
  }
  func.func @transform_1(%arg0: i32) -> (i32, i32) {
    %c0_i32 = arith.constant 0 : i32
    %c0_i32_0 = arith.constant 0 : i32
    %c0_i32_1 = arith.constant 0 : i32
    return %c0_i32, %c0_i32_0 : i32, i32
  }
  func.func @transform_2(%arg0: i32) -> (i32, i32) {
    %c0_i32 = arith.constant 0 : i32
    %c0_i32_0 = arith.constant 0 : i32
    %c0_i32_1 = arith.constant 0 : i32
    return %c0_i32, %c0_i32_0 : i32, i32
  }
  func.func @transform_3(%arg0: i32) -> (i32, i32) {
    %c0_i32 = arith.constant 0 : i32
    %c0_i32_0 = arith.constant 0 : i32
    %c0_i32_1 = arith.constant 0 : i32
    return %c0_i32, %c0_i32_0 : i32, i32
  }
  func.func @transform_4(%arg0: i32) -> (i32, i32) {
    %c0_i32 = arith.constant 0 : i32
    %c0_i32_0 = arith.constant 0 : i32
    %c0_i32_1 = arith.constant 0 : i32
    return %c0_i32, %c0_i32_0 : i32, i32
  }
  func.func @transform_5(%arg0: i32) -> (i32, i32) {
    %c0_i32 = arith.constant 0 : i32
    %c0_i32_0 = arith.constant 0 : i32
    %c0_i32_1 = arith.constant 0 : i32
    return %c0_i32, %c0_i32_0 : i32, i32
  }
  func.func @transform_6(%arg0: i32) -> (i32, i32) {
    %c0_i32 = arith.constant 0 : i32
    %c0_i32_0 = arith.constant 0 : i32
    %c0_i32_1 = arith.constant 0 : i32
    return %c0_i32, %c0_i32_0 : i32, i32
  }
  func.func @transform_7(%arg0: i32) -> (i32, i32) {
    %c0_i32 = arith.constant 0 : i32
    %c0_i32_0 = arith.constant 0 : i32
    %c0_i32_1 = arith.constant 0 : i32
    return %c0_i32, %c0_i32_0 : i32, i32
  }
  func.func @transform_8(%arg0: i32) -> (i32, i32, i32) {
    %c0_i32 = arith.constant 0 : i32
    %c0_i32_0 = arith.constant 0 : i32
    %c0_i32_1 = arith.constant 0 : i32
    return %arg0, %c0_i32, %c0_i32_0 : i32, i32, i32
  }
}

</mosaic_0001>

<llo_original>
// kernel: tpu_custom_call.1
$region0: #{tpu_custom_call.1}
  #allocation0 [shape = 'u32[]', space=smem, size = 0x4, offset = 0x4, fixed_abs, tag = 'smem constant byte address 0x4 - core index']
  #allocation1 [shape = 'u32[144,128]{1,0:T(1,128)}', space=vmem, size = 0x12000, scoped, tag = 'internal scratch']
  %s0 = inlined_call_operand.vmem [shape: s32[2,8], index: 0, kind: input, shape index: {}]
  %s1 = inlined_call_operand.vmem [shape: bf16[128,32], index: 1, kind: input, shape index: {}]
  %s2 = inlined_call_operand.vmem [shape: f32[8,32], index: 2, kind: input, shape index: {}]
  %s3 = inlined_call_operand.vmem [shape: bf16[32,96], index: 3, kind: input, shape index: {}]
  %s4 = inlined_call_operand.hbm [shape: bf16[32,128], index: 4, kind: input, shape index: {}]
  %s5 = inlined_call_operand.hbm [shape: f32[1,128], index: 5, kind: input, shape index: {}]
  %s6 = inlined_call_operand.vmem [shape: bf16[128,128], index: 6, kind: input, shape index: {}]
  %s7 = inlined_call_operand.vmem [shape: f32[1,128], index: 7, kind: input, shape index: {}]
  %s8 = inlined_call_operand.hbm [shape: f32[2,8,128], index: 8, kind: output, shape index: {}]
  %s9 = sld [smem:[#allocation0]]
  $region50: #{tpu_custom_call.1} parent=0
    _
  %s11 = ssub.s32 1, %s9
  %s12 = scalar_select 0, %s11, %s9
  $region1: #{tpu_custom_call.1} parent=0
    #allocation2 [shape = 'u8[8192]{0}', space=vmem, size = 0x2000, scoped, tag = 'input window, operand 4, single buffered']
    #allocation3 [shape = 's32[1]{0}', space=sflag, size = 0x4, scoped, tag = 'scoped memory for tpu_custom_call.1']
    #allocation4 [shape = 's32[1]{0}', space=sflag, size = 0x4, scoped, tag = 'scoped memory for tpu_custom_call.1']
    #allocation5 [shape = 'u8[512]{0}', space=vmem, size = 0x400, scoped, tag = 'input window, operand 5, single buffered']
    #allocation6 [shape = 's32[1]{0}', space=sflag, size = 0x4, scoped, tag = 'scoped memory for tpu_custom_call.1']
    #allocation7 [shape = 'u8[8192]{0}', space=vmem, size = 0x2000, scoped, tag = 'output window, operand 0, single buffered']
    %13 = vsyncpa [#allocation3], 0
    %14 = vsyncpa [#allocation6], 0
    %15 = vsyncpa [#allocation4], 0
    // Predicated region
    $region2: #{tpu_custom_call.1} parent=1 // pred_check
      _
    $region3: #{tpu_custom_call.1} parent=1 // pred_check_branch
      %17 = sbr.rel (0) target = $region5
    $region4: #{tpu_custom_call.1} parent=1 // pred_region
      _
    $region5: #{tpu_custom_call.1} parent=1 // pred_fallthru
      _
    // Predicated region
    $region6: #{tpu_custom_call.1} parent=1 // pred_check
      _
    $region7: #{tpu_custom_call.1} parent=1 // pred_check_branch
      %19 = sbr.rel (0) target = $region9
    $region8: #{tpu_custom_call.1} parent=1 // pred_region
      _
    $region9: #{tpu_custom_call.1} parent=1 // pred_fallthru
      _
    // Predicated region
    $region10: #{tpu_custom_call.1} parent=1 // pred_check
      _
    $region11: #{tpu_custom_call.1} parent=1 // pred_check_branch
      %21 = sbr.rel (0) target = $region13
    $region12: #{tpu_custom_call.1} parent=1 // pred_region
      _
    $region13: #{tpu_custom_call.1} parent=1 // pred_fallthru
      _
    // Predicated region
    $region14: #{tpu_custom_call.1} parent=1 // pred_check
      _
    $region15: #{tpu_custom_call.1} parent=1 // pred_check_branch
      %23 = sbr.rel (0) target = $region17
    $region16: #{tpu_custom_call.1} parent=1 // pred_region
      _
    $region17: #{tpu_custom_call.1} parent=1 // pred_fallthru
      _
    // Predicated region
    $region18: #{tpu_custom_call.1} parent=1 // pred_check
      _
    $region19: #{tpu_custom_call.1} parent=1 // pred_check_branch
      %25 = sbr.rel (0) target = $region21
    $region20: #{tpu_custom_call.1} parent=1 // pred_region
      %s27 = ssub.s32 256, 256
      %28 = vsyncadd [#allocation3], %s27
      %s29 = sshll.u32 [#allocation2], 4
      %s30 = int_to_ptr.vmem [resolvable:$true] %s29
      %35 = dma.hbm_to_vmem [thread:$0]  %s4, 256, %s30, [#allocation3], 64, 64, 4
    $region21: #{tpu_custom_call.1} parent=1 // pred_fallthru
      _
    // Predicated region
    $region22: #{tpu_custom_call.1} parent=1 // pred_check
      _
    $region23: #{tpu_custom_call.1} parent=1 // pred_check_branch
      %37 = sbr.rel (0) target = $region25
    $region24: #{tpu_custom_call.1} parent=1 // pred_region
      %s39 = ssub.s32 16, 16
      %40 = vsyncadd [#allocation6], %s39
      %s42 = sshll.u32 [#allocation5], 4
      %s43 = int_to_ptr.vmem [resolvable:$true] %s42
      %45 = dma.hbm_to_vmem [thread:$0]  %s5, 16, %s43, [#allocation6]
    $region25: #{tpu_custom_call.1} parent=1 // pred_fallthru
      _
    // Predicated region
    $region26: #{tpu_custom_call.1} parent=1 // pred_check
      _
    $region27: #{tpu_custom_call.1} parent=1 // pred_check_branch
      %47 = sbr.rel (0) target = $region29
    $region28: #{tpu_custom_call.1} parent=1 // pred_region
      _
    $region29: #{tpu_custom_call.1} parent=1 // pred_fallthru
      _
    // Predicated region
    $region30: #{tpu_custom_call.1} parent=1 // pred_check
      _
    $region31: #{tpu_custom_call.1} parent=1 // pred_check_branch
      %49 = sbr.rel (0) target = $region33
    $region32: #{tpu_custom_call.1} parent=1 // pred_region
      _
    $region33: #{tpu_custom_call.1} parent=1 // pred_fallthru
      _
    // Predicated region
    $region34: #{tpu_custom_call.1} parent=1 // pred_check
      _
    $region35: #{tpu_custom_call.1} parent=1 // pred_check_branch
      %51 = sbr.rel (0) target = $region37
    $region36: #{tpu_custom_call.1} parent=1 // pred_region
      %52 = dma.done [#allocation3], 256
    $region37: #{tpu_custom_call.1} parent=1 // pred_fallthru
      _
    // Predicated region
    $region38: #{tpu_custom_call.1} parent=1 // pred_check
      _
    $region39: #{tpu_custom_call.1} parent=1 // pred_check_branch
      %54 = sbr.rel (0) target = $region41
    $region40: #{tpu_custom_call.1} parent=1 // pred_region
      %55 = dma.done [#allocation6], 16
    $region41: #{tpu_custom_call.1} parent=1 // pred_fallthru
      _
    %v57 = vld [vmem:[%s0] sm:$0x3]
    %v58 = vlaneseq
    %v59 = vand.u32 %v58, 127
    %v60 = vlaneseq
    %v61 = vshrl.u32 %v60, 7
    %v62 = vsub.s32 0, %v61
    %v63 = vrot.slane %v57, %v62
    %65 = vbcast.lane.b32.xlu0 %v63, 256
    %v66 = vpop.permute.xlu0 %65
    %v67 = vlaneseq
    %v68 = vshrl.u32 %v67, 7
    %v69 = vsub.s32 1, %v68
    %v70 = vrot.slane %v57, %v69
    %72 = vbcast.lane.b32.xlu0 %v70, 256
    %v73 = vpop.permute.xlu0 %72
    %vm74 = vcmp.eq.s32.totalorder %v66, %v59
    %vm75 = vcmp.eq.s32.totalorder %v73, %v59
    %v76 = vsel %vm74, 1, 0
    %v77 = vsel %vm75, 1, 0
    %v78 = vcvt.s32.f32 %v76
    %v79 = vcvt.s32.f32 %v77
    %v80 = vpack.c.bf16 %v78, %v78
    %v81 = vpack.c.bf16 %v79, %v79
    %v82 = vld [vmem:[%s1] sm:$0xf]
    %v83 = vld [vmem:[%s1 + $0x4] sm:$0xf]
    %v84 = vld [vmem:[%s1 + $0x8] sm:$0xf]
    %v85 = vld [vmem:[%s1 + $0xc] sm:$0xf]
    %v86 = vld [vmem:[%s1 + $0x10] sm:$0xf]
    %v87 = vld [vmem:[%s1 + $0x14] sm:$0xf]
    %v88 = vld [vmem:[%s1 + $0x18] sm:$0xf]
    %v89 = vld [vmem:[%s1 + $0x1c] sm:$0xf]
    %v90 = vld [vmem:[%s1 + $0x20] sm:$0xf]
    %v91 = vld [vmem:[%s1 + $0x24] sm:$0xf]
    %v92 = vld [vmem:[%s1 + $0x28] sm:$0xf]
    %v93 = vld [vmem:[%s1 + $0x2c] sm:$0xf]
    %v94 = vld [vmem:[%s1 + $0x30] sm:$0xf]
    %v95 = vld [vmem:[%s1 + $0x34] sm:$0xf]
    %v96 = vld [vmem:[%s1 + $0x38] sm:$0xf]
    %v97 = vld [vmem:[%s1 + $0x3c] sm:$0xf]
    %v100 = vunpack.c.l.b16 %v80
    %v101 = vunpack.c.l.b16 %v81
    %v102 = vpack.c.b16 %v101, %v100
    %v120 = vunpack.c.l.b16 %v82
    %v121 = vunpack.c.l.b16 %v83
    %v122 = vunpack.c.l.b16 %v84
    %v123 = vunpack.c.l.b16 %v85
    %v124 = vunpack.c.l.b16 %v86
    %v125 = vunpack.c.l.b16 %v87
    %v126 = vunpack.c.l.b16 %v88
    %v127 = vunpack.c.l.b16 %v89
    %v128 = vunpack.c.l.b16 %v90
    %v129 = vunpack.c.l.b16 %v91
    %v130 = vunpack.c.l.b16 %v92
    %v131 = vunpack.c.l.b16 %v93
    %v132 = vunpack.c.l.b16 %v94
    %v133 = vunpack.c.l.b16 %v95
    %v134 = vunpack.c.l.b16 %v96
    %v135 = vunpack.c.l.b16 %v97
    %v136 = vpack.c.b16 %v121, %v120
    %v137 = vpack.c.b16 %v123, %v122
    %v138 = vpack.c.b16 %v125, %v124
    %v139 = vpack.c.b16 %v127, %v126
    %v140 = vpack.c.b16 %v129, %v128
    %v141 = vpack.c.b16 %v131, %v130
    %v142 = vpack.c.b16 %v133, %v132
    %v143 = vpack.c.b16 %v135, %v134
    %152 = vmatprep.subr.bf16.mxu0 0
    %153 = vmatpush1.bf16.msra.mxu0 %v143
    %154 = vmatprep.subr.bf16.mxu0 0
    %155 = vmatpush1.bf16.msra.mxu0 %v142
    %156 = vmatprep.subr.bf16.mxu0 0
    %157 = vmatpush1.bf16.msra.mxu0 %v141
    %158 = vmatprep.subr.bf16.mxu0 0
    %159 = vmatpush1.bf16.msra.mxu0 %v140
    %160 = vmatprep.subr.bf16.mxu0 0
    %161 = vmatpush1.bf16.msra.mxu0 %v139
    %162 = vmatprep.subr.bf16.mxu0 0
    %163 = vmatpush1.bf16.msra.mxu0 %v138
    %164 = vmatprep.subr.bf16.mxu0 0
    %165 = vmatpush1.bf16.msra.mxu0 %v137
    %166 = vmatprep.subr.bf16.mxu0 0
    %167 = vmatpush1.bf16.msra.mxu0 %v136
    %168 = vmatprep.subr.bf16.mxu0 0
    %169 = vmatpush2.bf16.msra.mxu0 0
    %170 = vmatprep.subr.bf16.mxu0 0
    %171 = vmatpush2.bf16.msra.mxu0 0
    %172 = vmatprep.subr.bf16.mxu0 0
    %173 = vmatpush2.bf16.msra.mxu0 0
    %174 = vmatprep.subr.bf16.mxu0 0
    %175 = vmatpush2.bf16.msra.mxu0 0
    %176 = vmatprep.subr.bf16.mxu0 0
    %177 = vmatpush2.bf16.msra.mxu0 0
    %178 = vmatprep.subr.bf16.mxu0 0
    %179 = vmatpush2.bf16.msra.mxu0 0
    %180 = vmatprep.subr.bf16.mxu0 0
    %181 = vmatpush2.bf16.msra.mxu0 0
    %182 = vmatprep.subr.bf16.mxu0 0
    %183 = vmatpush2.bf16.msra.mxu0 0
    %184 = vmatprep.mubr.bf16.mxu0 0
    %185 = vmatmul.mubr.bf16.gmra.mxu0 %v102
    %v186 = vpop.f32.mrf.mxu0
    %v187 = vadd.f32 0.0, %v186
    %v188 = vpop.f32.mrf.mxu0
    %v189 = vpop.f32.mrf.mxu0
    %v190 = vadd.f32 0.0, %v189
    %v191 = vpop.f32.mrf.mxu0
    %192 = vdwg.mxu0
    %v193 = vld [vmem:[%s2] sm:$0xff]
    %v194 = vadd.f32 %v187, %v193
    %v195 = vadd.f32 %v190, %v193
    %v196 = vpack.c.bf16 %v195, %v194
    %v197 = vld [vmem:[%s3] sm:$0xf]
    %v198 = vld [vmem:[%s3 + $0x4] sm:$0xf]
    %v199 = vld [vmem:[%s3 + $0x8] sm:$0xf]
    %v200 = vld [vmem:[%s3 + $0xc] sm:$0xf]
    %v205 = vunpack.c.l.b16 %v197
    %v206 = vunpack.c.l.b16 %v198
    %v207 = vunpack.c.l.b16 %v199
    %v208 = vunpack.c.l.b16 %v200
    %v209 = vpack.c.b16 %v206, %v205
    %v210 = vpack.c.b16 %v208, %v207
    %vm213 = vcmask 261120
    %v215 = vsel %vm213, %v196, 0
    %217 = vmatprep.subr.bf16.mxu0 0
    %218 = vmatpush1.bf16.msra.mxu0 0
    %219 = vmatprep.subr.bf16.mxu0 0
    %220 = vmatpush1.bf16.msra.mxu0 0
    %221 = vmatprep.subr.bf16.mxu0 0
    %222 = vmatpush1.bf16.msra.mxu0 0
    %223 = vmatprep.subr.bf16.mxu0 0
    %224 = vmatpush1.bf16.msra.mxu0 0
    %225 = vmatprep.subr.bf16.mxu0 0
    %226 = vmatpush1.bf16.msra.mxu0 0
    %227 = vmatprep.subr.bf16.mxu0 0
    %228 = vmatpush1.bf16.msra.mxu0 0
    %229 = vmatprep.subr.bf16.mxu0 0
    %230 = vmatpush1.bf16.msra.mxu0 %v210
    %231 = vmatprep.subr.bf16.mxu0 0
    %232 = vmatpush1.bf16.msra.mxu0 %v209
    %233 = vmatprep.subr.bf16.mxu0 0
    %234 = vmatpush2.bf16.msra.mxu0 0
    %235 = vmatprep.subr.bf16.mxu0 0
    %236 = vmatpush2.bf16.msra.mxu0 0
    %237 = vmatprep.subr.bf16.mxu0 0
    %238 = vmatpush2.bf16.msra.mxu0 0
    %239 = vmatprep.subr.bf16.mxu0 0
    %240 = vmatpush2.bf16.msra.mxu0 0
    %241 = vmatprep.subr.bf16.mxu0 0
    %242 = vmatpush2.bf16.msra.mxu0 0
    %243 = vmatprep.subr.bf16.mxu0 0
    %244 = vmatpush2.bf16.msra.mxu0 0
    %245 = vmatprep.subr.bf16.mxu0 0
    %246 = vmatpush2.bf16.msra.mxu0 0
    %247 = vmatprep.subr.bf16.mxu0 0
    %248 = vmatpush2.bf16.msra.mxu0 0
    %249 = vmatprep.mubr.bf16.mxu0 0
    %250 = vmatmul.mubr.bf16.gmra.mxu0 %v215
    %v251 = vpop.f32.mrf.mxu0
    %v252 = vadd.f32 0.0, %v251
    %v253 = vpop.f32.mrf.mxu0
    %v254 = vpop.f32.mrf.mxu0
    %v255 = vadd.f32 0.0, %v254
    %v256 = vpop.f32.mrf.mxu0
    %257 = vdwg.mxu0
    %v258 = vlaneseq
    %v259 = vshrl.u32 %v258, 7
    %vm260 = vcmp.le.s32.totalorder %v59, %v259
    %v261 = vpack.c.bf16 %v252, %v252
    %v262 = vpack.c.bf16 %v255, %v255
    %264 = vrot.lane.b32.xlu0 %v261, 96
    %v265 = vpop.permute.xlu0 %264
    %vm266 = vcmask 64512
    %v268 = vsel %vm266, %v261, 0
    %v271 = vsel %vm266, %v265, 0
    %273 = vmatprep.subr.bf16.mxu0 0
    %274 = vmatpush1.bf16.xpose.msra.mxu0 0
    %275 = vmatprep.subr.bf16.mxu0 0
    %276 = vmatpush1.bf16.xpose.msra.mxu0 0
    %277 = vmatprep.subr.bf16.mxu0 0
    %278 = vmatpush1.bf16.xpose.msra.mxu0 0
    %279 = vmatprep.subr.bf16.mxu0 0
    %280 = vmatpush1.bf16.xpose.msra.mxu0 0
    %281 = vmatprep.subr.bf16.mxu0 0
    %282 = vmatpush1.bf16.xpose.msra.mxu0 0
    %283 = vmatprep.subr.bf16.mxu0 0
    %284 = vmatpush1.bf16.xpose.msra.mxu0 0
    %285 = vmatprep.subr.bf16.mxu0 0
    %286 = vmatpush1.bf16.xpose.msra.mxu0 0
    %287 = vmatprep.subr.bf16.mxu0 0
    %288 = vmatpush1.bf16.xpose.msra.mxu0 %v271
    %289 = vmatprep.subr.bf16.mxu0 0
    %290 = vmatpush2.bf16.xpose.msra.mxu0 0
    %291 = vmatprep.subr.bf16.mxu0 0
    %292 = vmatpush2.bf16.xpose.msra.mxu0 0
    %293 = vmatprep.subr.bf16.mxu0 0
    %294 = vmatpush2.bf16.xpose.msra.mxu0 0
    %295 = vmatprep.subr.bf16.mxu0 0
    %296 = vmatpush2.bf16.xpose.msra.mxu0 0
    %297 = vmatprep.subr.bf16.mxu0 0
    %298 = vmatpush2.bf16.xpose.msra.mxu0 0
    %299 = vmatprep.subr.bf16.mxu0 0
    %300 = vmatpush2.bf16.xpose.msra.mxu0 0
    %301 = vmatprep.subr.bf16.mxu0 0
    %302 = vmatpush2.bf16.xpose.msra.mxu0 0
    %303 = vmatprep.subr.bf16.mxu0 0
    %304 = vmatpush2.bf16.xpose.msra.mxu0 0
    %305 = vmatprep.mubr.bf16.mxu0 0
    %306 = vmatmul.mubr.bf16.gmra.mxu0 %v268
    %v307 = vpop.f32.mrf.mxu0
    %v308 = vadd.f32 0.0, %v307
    %v309 = vpop.f32.mrf.mxu0
    %v310 = vpop.f32.mrf.mxu0
    %v311 = vpop.f32.mrf.mxu0
    %312 = vdwg.mxu0
    %314 = vrot.lane.b32.xlu0 %v262, 96
    %v315 = vpop.permute.xlu0 %314
    %v317 = vsel %vm266, %v262, 0
    %v320 = vsel %vm266, %v315, 0
    %322 = vmatprep.subr.bf16.mxu0 0
    %323 = vmatpush1.bf16.xpose.msra.mxu0 0
    %324 = vmatprep.subr.bf16.mxu0 0
    %325 = vmatpush1.bf16.xpose.msra.mxu0 0
    %326 = vmatprep.subr.bf16.mxu0 0
    %327 = vmatpush1.bf16.xpose.msra.mxu0 0
    %328 = vmatprep.subr.bf16.mxu0 0
    %329 = vmatpush1.bf16.xpose.msra.mxu0 0
    %330 = vmatprep.subr.bf16.mxu0 0
    %331 = vmatpush1.bf16.xpose.msra.mxu0 0
    %332 = vmatprep.subr.bf16.mxu0 0
    %333 = vmatpush1.bf16.xpose.msra.mxu0 0
    %334 = vmatprep.subr.bf16.mxu0 0
    %335 = vmatpush1.bf16.xpose.msra.mxu0 0
    %336 = vmatprep.subr.bf16.mxu0 0
    %337 = vmatpush1.bf16.xpose.msra.mxu0 %v320
    %338 = vmatprep.subr.bf16.mxu0 0
    %339 = vmatpush2.bf16.xpose.msra.mxu0 0
    %340 = vmatprep.subr.bf16.mxu0 0
    %341 = vmatpush2.bf16.xpose.msra.mxu0 0
    %342 = vmatprep.subr.bf16.mxu0 0
    %343 = vmatpush2.bf16.xpose.msra.mxu0 0
    %344 = vmatprep.subr.bf16.mxu0 0
    %345 = vmatpush2.bf16.xpose.msra.mxu0 0
    %346 = vmatprep.subr.bf16.mxu0 0
    %347 = vmatpush2.bf16.xpose.msra.mxu0 0
    %348 = vmatprep.subr.bf16.mxu0 0
    %349 = vmatpush2.bf16.xpose.msra.mxu0 0
    %350 = vmatprep.subr.bf16.mxu0 0
    %351 = vmatpush2.bf16.xpose.msra.mxu0 0
    %352 = vmatprep.subr.bf16.mxu0 0
    %353 = vmatpush2.bf16.xpose.msra.mxu0 0
    %354 = vmatprep.mubr.bf16.mxu0 0
    %355 = vmatmul.mubr.bf16.gmra.mxu0 %v317
    %v356 = vpop.f32.mrf.mxu0
    %v357 = vadd.f32 0.0, %v356
    %v358 = vpop.f32.mrf.mxu0
    %v359 = vpop.f32.mrf.mxu0
    %v360 = vpop.f32.mrf.mxu0
    %361 = vdwg.mxu0
    %v362 = vmul.f32 %v308, 0.17677669
    %v363 = vmul.f32 %v357, 0.17677669
    %v364 = vsel %vm260, 1, 0
    %vm365 = vcmp.eq.s32.totalorder %v364, 1
    %v366 = vsel %vm365, %v362, -1e+30
    %v367 = vsel %vm365, %v363, -1e+30
    %v368 = vsel %vm266, %v366, -inf
    %369 = vmax.xlane.f32.xlu0 %v368
    %v370 = vpop.xlane.xlu0 %369
    %v371 = vsel %vm266, %v367, -inf
    %372 = vmax.xlane.f32.xlu0 %v371
    %v373 = vpop.xlane.xlu0 %372
    %v374 = vsub.f32 %v366, %v370
    %v375 = vsub.f32 %v367, %v373
    %v376 = vmul.f32 %v374, 1.442695
    %v377 = vpow.pop %v376
    %v378 = vmul.f32 %v375, 1.442695
    %v379 = vpow.pop %v378
    %v380 = vsel %vm266, %v377, 0.0
    %381 = vadd.xlane.f32.xlu0 %v380
    %v382 = vpop.xlane.xlu0 %381
    %v383 = vsel %vm266, %v379, 0.0
    %384 = vadd.xlane.f32.xlu0 %v383
    %v385 = vpop.xlane.xlu0 %384
    %v386 = vrcp.pop %v382
    %v387 = vrcp.pop %v385
    %v388 = vmul.f32 %v377, %v386
    %v389 = vmul.f32 %v379, %v387
    %v390 = vpack.c.bf16 %v388, %v388
    %v391 = vpack.c.bf16 %v389, %v389
    %392 = vrot.lane.b32.xlu0 %v261, 64
    %v393 = vpop.permute.xlu0 %392
    %v395 = vsel %vm266, %v390, 0
    %vm397 = vcmask 1043456
    %v399 = vsel %vm397, %v393, 0
    %401 = vmatprep.subr.bf16.mxu0 0
    %402 = vmatpush1.bf16.msra.mxu0 0
    %403 = vmatprep.subr.bf16.mxu0 0
    %404 = vmatpush1.bf16.msra.mxu0 0
    %405 = vmatprep.subr.bf16.mxu0 0
    %406 = vmatpush1.bf16.msra.mxu0 0
    %407 = vmatprep.subr.bf16.mxu0 0
    %408 = vmatpush1.bf16.msra.mxu0 0
    %409 = vmatprep.subr.bf16.mxu0 0
    %410 = vmatpush1.bf16.msra.mxu0 0
    %411 = vmatprep.subr.bf16.mxu0 0
    %412 = vmatpush1.bf16.msra.mxu0 0
    %413 = vmatprep.subr.bf16.mxu0 0
    %414 = vmatpush1.bf16.msra.mxu0 0
    %415 = vmatprep.subr.bf16.mxu0 0
    %416 = vmatpush1.bf16.msra.mxu0 %v399
    %417 = vmatprep.subr.bf16.mxu0 0
    %418 = vmatpush2.bf16.msra.mxu0 0
    %419 = vmatprep.subr.bf16.mxu0 0
    %420 = vmatpush2.bf16.msra.mxu0 0
    %421 = vmatprep.subr.bf16.mxu0 0
    %422 = vmatpush2.bf16.msra.mxu0 0
    %423 = vmatprep.subr.bf16.mxu0 0
    %424 = vmatpush2.bf16.msra.mxu0 0
    %425 = vmatprep.subr.bf16.mxu0 0
    %426 = vmatpush2.bf16.msra.mxu0 0
    %427 = vmatprep.subr.bf16.mxu0 0
    %428 = vmatpush2.bf16.msra.mxu0 0
    %429 = vmatprep.subr.bf16.mxu0 0
    %430 = vmatpush2.bf16.msra.mxu0 0
    %431 = vmatprep.subr.bf16.mxu0 0
    %432 = vmatpush2.bf16.msra.mxu0 0
    %433 = vmatprep.mubr.bf16.mxu0 0
    %434 = vmatmul.mubr.bf16.gmra.mxu0 %v395
    %v435 = vpop.f32.mrf.mxu0
    %v436 = vadd.f32 0.0, %v435
    %v437 = vpop.f32.mrf.mxu0
    %v438 = vpop.f32.mrf.mxu0
    %v439 = vpop.f32.mrf.mxu0
    %440 = vdwg.mxu0
    %441 = vrot.lane.b32.xlu0 %v262, 64
    %v442 = vpop.permute.xlu0 %441
    %v444 = vsel %vm266, %v391, 0
    %v447 = vsel %vm397, %v442, 0
    %449 = vmatprep.subr.bf16.mxu0 0
    %450 = vmatpush1.bf16.msra.mxu0 0
    %451 = vmatprep.subr.bf16.mxu0 0
    %452 = vmatpush1.bf16.msra.mxu0 0
    %453 = vmatprep.subr.bf16.mxu0 0
    %454 = vmatpush1.bf16.msra.mxu0 0
    %455 = vmatprep.subr.bf16.mxu0 0
    %456 = vmatpush1.bf16.msra.mxu0 0
    %457 = vmatprep.subr.bf16.mxu0 0
    %458 = vmatpush1.bf16.msra.mxu0 0
    %459 = vmatprep.subr.bf16.mxu0 0
    %460 = vmatpush1.bf16.msra.mxu0 0
    %461 = vmatprep.subr.bf16.mxu0 0
    %462 = vmatpush1.bf16.msra.mxu0 0
    %463 = vmatprep.subr.bf16.mxu0 0
    %464 = vmatpush1.bf16.msra.mxu0 %v447
    %465 = vmatprep.subr.bf16.mxu0 0
    %466 = vmatpush2.bf16.msra.mxu0 0
    %467 = vmatprep.subr.bf16.mxu0 0
    %468 = vmatpush2.bf16.msra.mxu0 0
    %469 = vmatprep.subr.bf16.mxu0 0
    %470 = vmatpush2.bf16.msra.mxu0 0
    %471 = vmatprep.subr.bf16.mxu0 0
    %472 = vmatpush2.bf16.msra.mxu0 0
    %473 = vmatprep.subr.bf16.mxu0 0
    %474 = vmatpush2.bf16.msra.mxu0 0
    %475 = vmatprep.subr.bf16.mxu0 0
    %476 = vmatpush2.bf16.msra.mxu0 0
    %477 = vmatprep.subr.bf16.mxu0 0
    %478 = vmatpush2.bf16.msra.mxu0 0
    %479 = vmatprep.subr.bf16.mxu0 0
    %480 = vmatpush2.bf16.msra.mxu0 0
    %481 = vmatprep.mubr.bf16.mxu0 0
    %482 = vmatmul.mubr.bf16.gmra.mxu0 %v444
    %v483 = vpop.f32.mrf.mxu0
    %v484 = vadd.f32 0.0, %v483
    %v485 = vpop.f32.mrf.mxu0
    %v486 = vpop.f32.mrf.mxu0
    %v487 = vpop.f32.mrf.mxu0
    %488 = vdwg.mxu0
    %489 = vrot.lane.b32.xlu0 %v261, 120
    %v490 = vpop.permute.xlu0 %489
    %491 = vrot.lane.b32.xlu0 %v261, 88
    %v492 = vpop.permute.xlu0 %491
    %v494 = vsel %vm266, %v490, 0
    %v497 = vsel %vm266, %v492, 0
    %499 = vmatprep.subr.bf16.mxu0 0
    %500 = vmatpush1.bf16.xpose.msra.mxu0 0
    %501 = vmatprep.subr.bf16.mxu0 0
    %502 = vmatpush1.bf16.xpose.msra.mxu0 0
    %503 = vmatprep.subr.bf16.mxu0 0
    %504 = vmatpush1.bf16.xpose.msra.mxu0 0
    %505 = vmatprep.subr.bf16.mxu0 0
    %506 = vmatpush1.bf16.xpose.msra.mxu0 0
    %507 = vmatprep.subr.bf16.mxu0 0
    %508 = vmatpush1.bf16.xpose.msra.mxu0 0
    %509 = vmatprep.subr.bf16.mxu0 0
    %510 = vmatpush1.bf16.xpose.msra.mxu0 0
    %511 = vmatprep.subr.bf16.mxu0 0
    %512 = vmatpush1.bf16.xpose.msra.mxu0 0
    %513 = vmatprep.subr.bf16.mxu0 0
    %514 = vmatpush1.bf16.xpose.msra.mxu0 %v497
    %515 = vmatprep.subr.bf16.mxu0 0
    %516 = vmatpush2.bf16.xpose.msra.mxu0 0
    %517 = vmatprep.subr.bf16.mxu0 0
    %518 = vmatpush2.bf16.xpose.msra.mxu0 0
    %519 = vmatprep.subr.bf16.mxu0 0
    %520 = vmatpush2.bf16.xpose.msra.mxu0 0
    %521 = vmatprep.subr.bf16.mxu0 0
    %522 = vmatpush2.bf16.xpose.msra.mxu0 0
    %523 = vmatprep.subr.bf16.mxu0 0
    %524 = vmatpush2.bf16.xpose.msra.mxu0 0
    %525 = vmatprep.subr.bf16.mxu0 0
    %526 = vmatpush2.bf16.xpose.msra.mxu0 0
    %527 = vmatprep.subr.bf16.mxu0 0
    %528 = vmatpush2.bf16.xpose.msra.mxu0 0
    %529 = vmatprep.subr.bf16.mxu0 0
    %530 = vmatpush2.bf16.xpose.msra.mxu0 0
    %531 = vmatprep.mubr.bf16.mxu0 0
    %532 = vmatmul.mubr.bf16.gmra.mxu0 %v494
    %v533 = vpop.f32.mrf.mxu0
    %v534 = vadd.f32 0.0, %v533
    %v535 = vpop.f32.mrf.mxu0
    %v536 = vpop.f32.mrf.mxu0
    %v537 = vpop.f32.mrf.mxu0
    %538 = vdwg.mxu0
    %539 = vrot.lane.b32.xlu0 %v262, 120
    %v540 = vpop.permute.xlu0 %539
    %541 = vrot.lane.b32.xlu0 %v262, 88
    %v542 = vpop.permute.xlu0 %541
    %v544 = vsel %vm266, %v540, 0
    %v547 = vsel %vm266, %v542, 0
    %549 = vmatprep.subr.bf16.mxu0 0
    %550 = vmatpush1.bf16.xpose.msra.mxu0 0
    %551 = vmatprep.subr.bf16.mxu0 0
    %552 = vmatpush1.bf16.xpose.msra.mxu0 0
    %553 = vmatprep.subr.bf16.mxu0 0
    %554 = vmatpush1.bf16.xpose.msra.mxu0 0
    %555 = vmatprep.subr.bf16.mxu0 0
    %556 = vmatpush1.bf16.xpose.msra.mxu0 0
    %557 = vmatprep.subr.bf16.mxu0 0
    %558 = vmatpush1.bf16.xpose.msra.mxu0 0
    %559 = vmatprep.subr.bf16.mxu0 0
    %560 = vmatpush1.bf16.xpose.msra.mxu0 0
    %561 = vmatprep.subr.bf16.mxu0 0
    %562 = vmatpush1.bf16.xpose.msra.mxu0 0
    %563 = vmatprep.subr.bf16.mxu0 0
    %564 = vmatpush1.bf16.xpose.msra.mxu0 %v547
    %565 = vmatprep.subr.bf16.mxu0 0
    %566 = vmatpush2.bf16.xpose.msra.mxu0 0
    %567 = vmatprep.subr.bf16.mxu0 0
    %568 = vmatpush2.bf16.xpose.msra.mxu0 0
    %569 = vmatprep.subr.bf16.mxu0 0
    %570 = vmatpush2.bf16.xpose.msra.mxu0 0
    %571 = vmatprep.subr.bf16.mxu0 0
    %572 = vmatpush2.bf16.xpose.msra.mxu0 0
    %573 = vmatprep.subr.bf16.mxu0 0
    %574 = vmatpush2.bf16.xpose.msra.mxu0 0
    %575 = vmatprep.subr.bf16.mxu0 0
    %576 = vmatpush2.bf16.xpose.msra.mxu0 0
    %577 = vmatprep.subr.bf16.mxu0 0
    %578 = vmatpush2.bf16.xpose.msra.mxu0 0
    %579 = vmatprep.subr.bf16.mxu0 0
    %580 = vmatpush2.bf16.xpose.msra.mxu0 0
    %581 = vmatprep.mubr.bf16.mxu0 0
    %582 = vmatmul.mubr.bf16.gmra.mxu0 %v544
    %v583 = vpop.f32.mrf.mxu0
    %v584 = vadd.f32 0.0, %v583
    %v585 = vpop.f32.mrf.mxu0
    %v586 = vpop.f32.mrf.mxu0
    %v587 = vpop.f32.mrf.mxu0
    %588 = vdwg.mxu0
    %v589 = vmul.f32 %v534, 0.17677669
    %v590 = vmul.f32 %v584, 0.17677669
    %v591 = vsel %vm365, %v589, -1e+30
    %v592 = vsel %vm365, %v590, -1e+30
    %v593 = vsel %vm266, %v591, -inf
    %594 = vmax.xlane.f32.xlu0 %v593
    %v595 = vpop.xlane.xlu0 %594
    %v596 = vsel %vm266, %v592, -inf
    %597 = vmax.xlane.f32.xlu0 %v596
    %v598 = vpop.xlane.xlu0 %597
    %v599 = vsub.f32 %v591, %v595
    %v600 = vsub.f32 %v592, %v598
    %v601 = vmul.f32 %v599, 1.442695
    %v602 = vpow.pop %v601
    %v603 = vmul.f32 %v600, 1.442695
    %v604 = vpow.pop %v603
    %v605 = vsel %vm266, %v602, 0.0
    %606 = vadd.xlane.f32.xlu0 %v605
    %v607 = vpop.xlane.xlu0 %606
    %v608 = vsel %vm266, %v604, 0.0
    %609 = vadd.xlane.f32.xlu0 %v608
    %v610 = vpop.xlane.xlu0 %609
    %v611 = vrcp.pop %v607
    %v612 = vrcp.pop %v610
    %v613 = vmul.f32 %v602, %v611
    %v614 = vmul.f32 %v604, %v612
    %v615 = vpack.c.bf16 %v613, %v613
    %v616 = vpack.c.bf16 %v614, %v614
    %617 = vrot.lane.b32.xlu0 %v261, 56
    %v618 = vpop.permute.xlu0 %617
    %v620 = vsel %vm266, %v615, 0
    %v623 = vsel %vm397, %v618, 0
    %625 = vmatprep.subr.bf16.mxu0 0
    %626 = vmatpush1.bf16.msra.mxu0 0
    %627 = vmatprep.subr.bf16.mxu0 0
    %628 = vmatpush1.bf16.msra.mxu0 0
    %629 = vmatprep.subr.bf16.mxu0 0
    %630 = vmatpush1.bf16.msra.mxu0 0
    %631 = vmatprep.subr.bf16.mxu0 0
    %632 = vmatpush1.bf16.msra.mxu0 0
    %633 = vmatprep.subr.bf16.mxu0 0
    %634 = vmatpush1.bf16.msra.mxu0 0
    %635 = vmatprep.subr.bf16.mxu0 0
    %636 = vmatpush1.bf16.msra.mxu0 0
    %637 = vmatprep.subr.bf16.mxu0 0
    %638 = vmatpush1.bf16.msra.mxu0 0
    %639 = vmatprep.subr.bf16.mxu0 0
    %640 = vmatpush1.bf16.msra.mxu0 %v623
    %641 = vmatprep.subr.bf16.mxu0 0
    %642 = vmatpush2.bf16.msra.mxu0 0
    %643 = vmatprep.subr.bf16.mxu0 0
    %644 = vmatpush2.bf16.msra.mxu0 0
    %645 = vmatprep.subr.bf16.mxu0 0
    %646 = vmatpush2.bf16.msra.mxu0 0
    %647 = vmatprep.subr.bf16.mxu0 0
    %648 = vmatpush2.bf16.msra.mxu0 0
    %649 = vmatprep.subr.bf16.mxu0 0
    %650 = vmatpush2.bf16.msra.mxu0 0
    %651 = vmatprep.subr.bf16.mxu0 0
    %652 = vmatpush2.bf16.msra.mxu0 0
    %653 = vmatprep.subr.bf16.mxu0 0
    %654 = vmatpush2.bf16.msra.mxu0 0
    %655 = vmatprep.subr.bf16.mxu0 0
    %656 = vmatpush2.bf16.msra.mxu0 0
    %657 = vmatprep.mubr.bf16.mxu0 0
    %658 = vmatmul.mubr.bf16.gmra.mxu0 %v620
    %v659 = vpop.f32.mrf.mxu0
    %v660 = vadd.f32 0.0, %v659
    %v661 = vpop.f32.mrf.mxu0
    %v662 = vpop.f32.mrf.mxu0
    %v663 = vpop.f32.mrf.mxu0
    %664 = vdwg.mxu0
    %665 = vrot.lane.b32.xlu0 %v262, 56
    %v666 = vpop.permute.xlu0 %665
    %v668 = vsel %vm266, %v616, 0
    %v671 = vsel %vm397, %v666, 0
    %673 = vmatprep.subr.bf16.mxu0 0
    %674 = vmatpush1.bf16.msra.mxu0 0
    %675 = vmatprep.subr.bf16.mxu0 0
    %676 = vmatpush1.bf16.msra.mxu0 0
    %677 = vmatprep.subr.bf16.mxu0 0
    %678 = vmatpush1.bf16.msra.mxu0 0
    %679 = vmatprep.subr.bf16.mxu0 0
    %680 = vmatpush1.bf16.msra.mxu0 0
    %681 = vmatprep.subr.bf16.mxu0 0
    %682 = vmatpush1.bf16.msra.mxu0 0
    %683 = vmatprep.subr.bf16.mxu0 0
    %684 = vmatpush1.bf16.msra.mxu0 0
    %685 = vmatprep.subr.bf16.mxu0 0
    %686 = vmatpush1.bf16.msra.mxu0 0
    %687 = vmatprep.subr.bf16.mxu0 0
    %688 = vmatpush1.bf16.msra.mxu0 %v671
    %689 = vmatprep.subr.bf16.mxu0 0
    %690 = vmatpush2.bf16.msra.mxu0 0
    %691 = vmatprep.subr.bf16.mxu0 0
    %692 = vmatpush2.bf16.msra.mxu0 0
    %693 = vmatprep.subr.bf16.mxu0 0
    %694 = vmatpush2.bf16.msra.mxu0 0
    %695 = vmatprep.subr.bf16.mxu0 0
    %696 = vmatpush2.bf16.msra.mxu0 0
    %697 = vmatprep.subr.bf16.mxu0 0
    %698 = vmatpush2.bf16.msra.mxu0 0
    %699 = vmatprep.subr.bf16.mxu0 0
    %700 = vmatpush2.bf16.msra.mxu0 0
    %701 = vmatprep.subr.bf16.mxu0 0
    %702 = vmatpush2.bf16.msra.mxu0 0
    %703 = vmatprep.subr.bf16.mxu0 0
    %704 = vmatpush2.bf16.msra.mxu0 0
    %705 = vmatprep.mubr.bf16.mxu0 0
    %706 = vmatmul.mubr.bf16.gmra.mxu0 %v668
    %v707 = vpop.f32.mrf.mxu0
    %v708 = vadd.f32 0.0, %v707
    %v709 = vpop.f32.mrf.mxu0
    %v710 = vpop.f32.mrf.mxu0
    %v711 = vpop.f32.mrf.mxu0
    %712 = vdwg.mxu0
    %713 = vrot.lane.b32.xlu0 %v261, 112
    %v714 = vpop.permute.xlu0 %713
    %715 = vrot.lane.b32.xlu0 %v261, 80
    %v716 = vpop.permute.xlu0 %715
    %v718 = vsel %vm266, %v714, 0
    %v721 = vsel %vm266, %v716, 0
    %723 = vmatprep.subr.bf16.mxu0 0
    %724 = vmatpush1.bf16.xpose.msra.mxu0 0
    %725 = vmatprep.subr.bf16.mxu0 0
    %726 = vmatpush1.bf16.xpose.msra.mxu0 0
    %727 = vmatprep.subr.bf16.mxu0 0
    %728 = vmatpush1.bf16.xpose.msra.mxu0 0
    %729 = vmatprep.subr.bf16.mxu0 0
    %730 = vmatpush1.bf16.xpose.msra.mxu0 0
    %731 = vmatprep.subr.bf16.mxu0 0
    %732 = vmatpush1.bf16.xpose.msra.mxu0 0
    %733 = vmatprep.subr.bf16.mxu0 0
    %734 = vmatpush1.bf16.xpose.msra.mxu0 0
    %735 = vmatprep.subr.bf16.mxu0 0
    %736 = vmatpush1.bf16.xpose.msra.mxu0 0
    %737 = vmatprep.subr.bf16.mxu0 0
    %738 = vmatpush1.bf16.xpose.msra.mxu0 %v721
    %739 = vmatprep.subr.bf16.mxu0 0
    %740 = vmatpush2.bf16.xpose.msra.mxu0 0
    %741 = vmatprep.subr.bf16.mxu0 0
    %742 = vmatpush2.bf16.xpose.msra.mxu0 0
    %743 = vmatprep.subr.bf16.mxu0 0
    %744 = vmatpush2.bf16.xpose.msra.mxu0 0
    %745 = vmatprep.subr.bf16.mxu0 0
    %746 = vmatpush2.bf16.xpose.msra.mxu0 0
    %747 = vmatprep.subr.bf16.mxu0 0
    %748 = vmatpush2.bf16.xpose.msra.mxu0 0
    %749 = vmatprep.subr.bf16.mxu0 0
    %750 = vmatpush2.bf16.xpose.msra.mxu0 0
    %751 = vmatprep.subr.bf16.mxu0 0
    %752 = vmatpush2.bf16.xpose.msra.mxu0 0
    %753 = vmatprep.subr.bf16.mxu0 0
    %754 = vmatpush2.bf16.xpose.msra.mxu0 0
    %755 = vmatprep.mubr.bf16.mxu0 0
    %756 = vmatmul.mubr.bf16.gmra.mxu0 %v718
    %v757 = vpop.f32.mrf.mxu0
    %v758 = vadd.f32 0.0, %v757
    %v759 = vpop.f32.mrf.mxu0
    %v760 = vpop.f32.mrf.mxu0
    %v761 = vpop.f32.mrf.mxu0
    %762 = vdwg.mxu0
    %763 = vrot.lane.b32.xlu0 %v262, 112
    %v764 = vpop.permute.xlu0 %763
    %765 = vrot.lane.b32.xlu0 %v262, 80
    %v766 = vpop.permute.xlu0 %765
    %v768 = vsel %vm266, %v764, 0
    %v771 = vsel %vm266, %v766, 0
    %773 = vmatprep.subr.bf16.mxu0 0
    %774 = vmatpush1.bf16.xpose.msra.mxu0 0
    %775 = vmatprep.subr.bf16.mxu0 0
    %776 = vmatpush1.bf16.xpose.msra.mxu0 0
    %777 = vmatprep.subr.bf16.mxu0 0
    %778 = vmatpush1.bf16.xpose.msra.mxu0 0
    %779 = vmatprep.subr.bf16.mxu0 0
    %780 = vmatpush1.bf16.xpose.msra.mxu0 0
    %781 = vmatprep.subr.bf16.mxu0 0
    %782 = vmatpush1.bf16.xpose.msra.mxu0 0
    %783 = vmatprep.subr.bf16.mxu0 0
    %784 = vmatpush1.bf16.xpose.msra.mxu0 0
    %785 = vmatprep.subr.bf16.mxu0 0
    %786 = vmatpush1.bf16.xpose.msra.mxu0 0
    %787 = vmatprep.subr.bf16.mxu0 0
    %788 = vmatpush1.bf16.xpose.msra.mxu0 %v771
    %789 = vmatprep.subr.bf16.mxu0 0
    %790 = vmatpush2.bf16.xpose.msra.mxu0 0
    %791 = vmatprep.subr.bf16.mxu0 0
    %792 = vmatpush2.bf16.xpose.msra.mxu0 0
    %793 = vmatprep.subr.bf16.mxu0 0
    %794 = vmatpush2.bf16.xpose.msra.mxu0 0
    %795 = vmatprep.subr.bf16.mxu0 0
    %796 = vmatpush2.bf16.xpose.msra.mxu0 0
    %797 = vmatprep.subr.bf16.mxu0 0
    %798 = vmatpush2.bf16.xpose.msra.mxu0 0
    %799 = vmatprep.subr.bf16.mxu0 0
    %800 = vmatpush2.bf16.xpose.msra.mxu0 0
    %801 = vmatprep.subr.bf16.mxu0 0
    %802 = vmatpush2.bf16.xpose.msra.mxu0 0
    %803 = vmatprep.subr.bf16.mxu0 0
    %804 = vmatpush2.bf16.xpose.msra.mxu0 0
    %805 = vmatprep.mubr.bf16.mxu0 0
    %806 = vmatmul.mubr.bf16.gmra.mxu0 %v768
    %v807 = vpop.f32.mrf.mxu0
    %v808 = vadd.f32 0.0, %v807
    %v809 = vpop.f32.mrf.mxu0
    %v810 = vpop.f32.mrf.mxu0
    %v811 = vpop.f32.mrf.mxu0
    %812 = vdwg.mxu0
    %v813 = vmul.f32 %v758, 0.17677669
    %v814 = vmul.f32 %v808, 0.17677669
    %v815 = vsel %vm365, %v813, -1e+30
    %v816 = vsel %vm365, %v814, -1e+30
    %v817 = vsel %vm266, %v815, -inf
    %818 = vmax.xlane.f32.xlu0 %v817
    %v819 = vpop.xlane.xlu0 %818
    %v820 = vsel %vm266, %v816, -inf
    %821 = vmax.xlane.f32.xlu0 %v820
    %v822 = vpop.xlane.xlu0 %821
    %v823 = vsub.f32 %v815, %v819
    %v824 = vsub.f32 %v816, %v822
    %v825 = vmul.f32 %v823, 1.442695
    %v826 = vpow.pop %v825
    %v827 = vmul.f32 %v824, 1.442695
    %v828 = vpow.pop %v827
    %v829 = vsel %vm266, %v826, 0.0
    %830 = vadd.xlane.f32.xlu0 %v829
    %v831 = vpop.xlane.xlu0 %830
    %v832 = vsel %vm266, %v828, 0.0
    %833 = vadd.xlane.f32.xlu0 %v832
    %v834 = vpop.xlane.xlu0 %833
    %v835 = vrcp.pop %v831
    %v836 = vrcp.pop %v834
    %v837 = vmul.f32 %v826, %v835
    %v838 = vmul.f32 %v828, %v836
    %v839 = vpack.c.bf16 %v837, %v837
    %v840 = vpack.c.bf16 %v838, %v838
    %841 = vrot.lane.b32.xlu0 %v261, 48
    %v842 = vpop.permute.xlu0 %841
    %v844 = vsel %vm266, %v839, 0
    %v847 = vsel %vm397, %v842, 0
    %849 = vmatprep.subr.bf16.mxu0 0
    %850 = vmatpush1.bf16.msra.mxu0 0
    %851 = vmatprep.subr.bf16.mxu0 0
    %852 = vmatpush1.bf16.msra.mxu0 0
    %853 = vmatprep.subr.bf16.mxu0 0
    %854 = vmatpush1.bf16.msra.mxu0 0
    %855 = vmatprep.subr.bf16.mxu0 0
    %856 = vmatpush1.bf16.msra.mxu0 0
    %857 = vmatprep.subr.bf16.mxu0 0
    %858 = vmatpush1.bf16.msra.mxu0 0
    %859 = vmatprep.subr.bf16.mxu0 0
    %860 = vmatpush1.bf16.msra.mxu0 0
    %861 = vmatprep.subr.bf16.mxu0 0
    %862 = vmatpush1.bf16.msra.mxu0 0
    %863 = vmatprep.subr.bf16.mxu0 0
    %864 = vmatpush1.bf16.msra.mxu0 %v847
    %865 = vmatprep.subr.bf16.mxu0 0
    %866 = vmatpush2.bf16.msra.mxu0 0
    %867 = vmatprep.subr.bf16.mxu0 0
    %868 = vmatpush2.bf16.msra.mxu0 0
    %869 = vmatprep.subr.bf16.mxu0 0
    %870 = vmatpush2.bf16.msra.mxu0 0
    %871 = vmatprep.subr.bf16.mxu0 0
    %872 = vmatpush2.bf16.msra.mxu0 0
    %873 = vmatprep.subr.bf16.mxu0 0
    %874 = vmatpush2.bf16.msra.mxu0 0
    %875 = vmatprep.subr.bf16.mxu0 0
    %876 = vmatpush2.bf16.msra.mxu0 0
    %877 = vmatprep.subr.bf16.mxu0 0
    %878 = vmatpush2.bf16.msra.mxu0 0
    %879 = vmatprep.subr.bf16.mxu0 0
    %880 = vmatpush2.bf16.msra.mxu0 0
    %881 = vmatprep.mubr.bf16.mxu0 0
    %882 = vmatmul.mubr.bf16.gmra.mxu0 %v844
    %v883 = vpop.f32.mrf.mxu0
    %v884 = vadd.f32 0.0, %v883
    %v885 = vpop.f32.mrf.mxu0
    %v886 = vpop.f32.mrf.mxu0
    %v887 = vpop.f32.mrf.mxu0
    %888 = vdwg.mxu0
    %889 = vrot.lane.b32.xlu0 %v262, 48
    %v890 = vpop.permute.xlu0 %889
    %v892 = vsel %vm266, %v840, 0
    %v895 = vsel %vm397, %v890, 0
    %897 = vmatprep.subr.bf16.mxu0 0
    %898 = vmatpush1.bf16.msra.mxu0 0
    %899 = vmatprep.subr.bf16.mxu0 0
    %900 = vmatpush1.bf16.msra.mxu0 0
    %901 = vmatprep.subr.bf16.mxu0 0
    %902 = vmatpush1.bf16.msra.mxu0 0
    %903 = vmatprep.subr.bf16.mxu0 0
    %904 = vmatpush1.bf16.msra.mxu0 0
    %905 = vmatprep.subr.bf16.mxu0 0
    %906 = vmatpush1.bf16.msra.mxu0 0
    %907 = vmatprep.subr.bf16.mxu0 0
    %908 = vmatpush1.bf16.msra.mxu0 0
    %909 = vmatprep.subr.bf16.mxu0 0
    %910 = vmatpush1.bf16.msra.mxu0 0
    %911 = vmatprep.subr.bf16.mxu0 0
    %912 = vmatpush1.bf16.msra.mxu0 %v895
    %913 = vmatprep.subr.bf16.mxu0 0
    %914 = vmatpush2.bf16.msra.mxu0 0
    %915 = vmatprep.subr.bf16.mxu0 0
    %916 = vmatpush2.bf16.msra.mxu0 0
    %917 = vmatprep.subr.bf16.mxu0 0
    %918 = vmatpush2.bf16.msra.mxu0 0
    %919 = vmatprep.subr.bf16.mxu0 0
    %920 = vmatpush2.bf16.msra.mxu0 0
    %921 = vmatprep.subr.bf16.mxu0 0
    %922 = vmatpush2.bf16.msra.mxu0 0
    %923 = vmatprep.subr.bf16.mxu0 0
    %924 = vmatpush2.bf16.msra.mxu0 0
    %925 = vmatprep.subr.bf16.mxu0 0
    %926 = vmatpush2.bf16.msra.mxu0 0
    %927 = vmatprep.subr.bf16.mxu0 0
    %928 = vmatpush2.bf16.msra.mxu0 0
    %929 = vmatprep.mubr.bf16.mxu0 0
    %930 = vmatmul.mubr.bf16.gmra.mxu0 %v892
    %v931 = vpop.f32.mrf.mxu0
    %v932 = vadd.f32 0.0, %v931
    %v933 = vpop.f32.mrf.mxu0
    %v934 = vpop.f32.mrf.mxu0
    %v935 = vpop.f32.mrf.mxu0
    %936 = vdwg.mxu0
    %937 = vrot.lane.b32.xlu0 %v261, 104
    %v938 = vpop.permute.xlu0 %937
    %939 = vrot.lane.b32.xlu0 %v261, 72
    %v940 = vpop.permute.xlu0 %939
    %v942 = vsel %vm266, %v938, 0
    %v945 = vsel %vm266, %v940, 0
    %947 = vmatprep.subr.bf16.mxu0 0
    %948 = vmatpush1.bf16.xpose.msra.mxu0 0
    %949 = vmatprep.subr.bf16.mxu0 0
    %950 = vmatpush1.bf16.xpose.msra.mxu0 0
    %951 = vmatprep.subr.bf16.mxu0 0
    %952 = vmatpush1.bf16.xpose.msra.mxu0 0
    %953 = vmatprep.subr.bf16.mxu0 0
    %954 = vmatpush1.bf16.xpose.msra.mxu0 0
    %955 = vmatprep.subr.bf16.mxu0 0
    %956 = vmatpush1.bf16.xpose.msra.mxu0 0
    %957 = vmatprep.subr.bf16.mxu0 0
    %958 = vmatpush1.bf16.xpose.msra.mxu0 0
    %959 = vmatprep.subr.bf16.mxu0 0
    %960 = vmatpush1.bf16.xpose.msra.mxu0 0
    %961 = vmatprep.subr.bf16.mxu0 0
    %962 = vmatpush1.bf16.xpose.msra.mxu0 %v945
    %963 = vmatprep.subr.bf16.mxu0 0
    %964 = vmatpush2.bf16.xpose.msra.mxu0 0
    %965 = vmatprep.subr.bf16.mxu0 0
    %966 = vmatpush2.bf16.xpose.msra.mxu0 0
    %967 = vmatprep.subr.bf16.mxu0 0
    %968 = vmatpush2.bf16.xpose.msra.mxu0 0
    %969 = vmatprep.subr.bf16.mxu0 0
    %970 = vmatpush2.bf16.xpose.msra.mxu0 0
    %971 = vmatprep.subr.bf16.mxu0 0
    %972 = vmatpush2.bf16.xpose.msra.mxu0 0
    %973 = vmatprep.subr.bf16.mxu0 0
    %974 = vmatpush2.bf16.xpose.msra.mxu0 0
    %975 = vmatprep.subr.bf16.mxu0 0
    %976 = vmatpush2.bf16.xpose.msra.mxu0 0
    %977 = vmatprep.subr.bf16.mxu0 0
    %978 = vmatpush2.bf16.xpose.msra.mxu0 0
    %979 = vmatprep.mubr.bf16.mxu0 0
    %980 = vmatmul.mubr.bf16.gmra.mxu0 %v942
    %v981 = vpop.f32.mrf.mxu0
    %v982 = vadd.f32 0.0, %v981
    %v983 = vpop.f32.mrf.mxu0
    %v984 = vpop.f32.mrf.mxu0
    %v985 = vpop.f32.mrf.mxu0
    %986 = vdwg.mxu0
    %987 = vrot.lane.b32.xlu0 %v262, 104
    %v988 = vpop.permute.xlu0 %987
    %989 = vrot.lane.b32.xlu0 %v262, 72
    %v990 = vpop.permute.xlu0 %989
    %v992 = vsel %vm266, %v988, 0
    %v995 = vsel %vm266, %v990, 0
    %997 = vmatprep.subr.bf16.mxu0 0
    %998 = vmatpush1.bf16.xpose.msra.mxu0 0
    %999 = vmatprep.subr.bf16.mxu0 0
    %1000 = vmatpush1.bf16.xpose.msra.mxu0 0
    %1001 = vmatprep.subr.bf16.mxu0 0
    %1002 = vmatpush1.bf16.xpose.msra.mxu0 0
    %1003 = vmatprep.subr.bf16.mxu0 0
    %1004 = vmatpush1.bf16.xpose.msra.mxu0 0
    %1005 = vmatprep.subr.bf16.mxu0 0
    %1006 = vmatpush1.bf16.xpose.msra.mxu0 0
    %1007 = vmatprep.subr.bf16.mxu0 0
    %1008 = vmatpush1.bf16.xpose.msra.mxu0 0
    %1009 = vmatprep.subr.bf16.mxu0 0
    %1010 = vmatpush1.bf16.xpose.msra.mxu0 0
    %1011 = vmatprep.subr.bf16.mxu0 0
    %1012 = vmatpush1.bf16.xpose.msra.mxu0 %v995
    %1013 = vmatprep.subr.bf16.mxu0 0
    %1014 = vmatpush2.bf16.xpose.msra.mxu0 0
    %1015 = vmatprep.subr.bf16.mxu0 0
    %1016 = vmatpush2.bf16.xpose.msra.mxu0 0
    %1017 = vmatprep.subr.bf16.mxu0 0
    %1018 = vmatpush2.bf16.xpose.msra.mxu0 0
    %1019 = vmatprep.subr.bf16.mxu0 0
    %1020 = vmatpush2.bf16.xpose.msra.mxu0 0
    %1021 = vmatprep.subr.bf16.mxu0 0
    %1022 = vmatpush2.bf16.xpose.msra.mxu0 0
    %1023 = vmatprep.subr.bf16.mxu0 0
    %1024 = vmatpush2.bf16.xpose.msra.mxu0 0
    %1025 = vmatprep.subr.bf16.mxu0 0
    %1026 = vmatpush2.bf16.xpose.msra.mxu0 0
    %1027 = vmatprep.subr.bf16.mxu0 0
    %1028 = vmatpush2.bf16.xpose.msra.mxu0 0
    %1029 = vmatprep.mubr.bf16.mxu0 0
    %1030 = vmatmul.mubr.bf16.gmra.mxu0 %v992
    %v1031 = vpop.f32.mrf.mxu0
    %v1032 = vadd.f32 0.0, %v1031
    %v1033 = vpop.f32.mrf.mxu0
    %v1034 = vpop.f32.mrf.mxu0
    %v1035 = vpop.f32.mrf.mxu0
    %1036 = vdwg.mxu0
    %v1037 = vmul.f32 %v982, 0.17677669
    %v1038 = vmul.f32 %v1032, 0.17677669
    %v1039 = vsel %vm365, %v1037, -1e+30
    %v1040 = vsel %vm365, %v1038, -1e+30
    %v1041 = vsel %vm266, %v1039, -inf
    %1042 = vmax.xlane.f32.xlu0 %v1041
    %v1043 = vpop.xlane.xlu0 %1042
    %v1044 = vsel %vm266, %v1040, -inf
    %1045 = vmax.xlane.f32.xlu0 %v1044
    %v1046 = vpop.xlane.xlu0 %1045
    %v1047 = vsub.f32 %v1039, %v1043
    %v1048 = vsub.f32 %v1040, %v1046
    %v1049 = vmul.f32 %v1047, 1.442695
    %v1050 = vpow.pop %v1049
    %v1051 = vmul.f32 %v1048, 1.442695
    %v1052 = vpow.pop %v1051
    %v1053 = vsel %vm266, %v1050, 0.0
    %1054 = vadd.xlane.f32.xlu0 %v1053
    %v1055 = vpop.xlane.xlu0 %1054
    %v1056 = vsel %vm266, %v1052, 0.0
    %1057 = vadd.xlane.f32.xlu0 %v1056
    %v1058 = vpop.xlane.xlu0 %1057
    %v1059 = vrcp.pop %v1055
    %v1060 = vrcp.pop %v1058
    %v1061 = vmul.f32 %v1050, %v1059
    %v1062 = vmul.f32 %v1052, %v1060
    %v1063 = vpack.c.bf16 %v1061, %v1061
    %v1064 = vpack.c.bf16 %v1062, %v1062
    %1065 = vrot.lane.b32.xlu0 %v261, 40
    %v1066 = vpop.permute.xlu0 %1065
    %v1068 = vsel %vm266, %v1063, 0
    %v1071 = vsel %vm397, %v1066, 0
    %1073 = vmatprep.subr.bf16.mxu0 0
    %1074 = vmatpush1.bf16.msra.mxu0 0
    %1075 = vmatprep.subr.bf16.mxu0 0
    %1076 = vmatpush1.bf16.msra.mxu0 0
    %1077 = vmatprep.subr.bf16.mxu0 0
    %1078 = vmatpush1.bf16.msra.mxu0 0
    %1079 = vmatprep.subr.bf16.mxu0 0
    %1080 = vmatpush1.bf16.msra.mxu0 0
    %1081 = vmatprep.subr.bf16.mxu0 0
    %1082 = vmatpush1.bf16.msra.mxu0 0
    %1083 = vmatprep.subr.bf16.mxu0 0
    %1084 = vmatpush1.bf16.msra.mxu0 0
    %1085 = vmatprep.subr.bf16.mxu0 0
    %1086 = vmatpush1.bf16.msra.mxu0 0
    %1087 = vmatprep.subr.bf16.mxu0 0
    %1088 = vmatpush1.bf16.msra.mxu0 %v1071
    %1089 = vmatprep.subr.bf16.mxu0 0
    %1090 = vmatpush2.bf16.msra.mxu0 0
    %1091 = vmatprep.subr.bf16.mxu0 0
    %1092 = vmatpush2.bf16.msra.mxu0 0
    %1093 = vmatprep.subr.bf16.mxu0 0
    %1094 = vmatpush2.bf16.msra.mxu0 0
    %1095 = vmatprep.subr.bf16.mxu0 0
    %1096 = vmatpush2.bf16.msra.mxu0 0
    %1097 = vmatprep.subr.bf16.mxu0 0
    %1098 = vmatpush2.bf16.msra.mxu0 0
    %1099 = vmatprep.subr.bf16.mxu0 0
    %1100 = vmatpush2.bf16.msra.mxu0 0
    %1101 = vmatprep.subr.bf16.mxu0 0
    %1102 = vmatpush2.bf16.msra.mxu0 0
    %1103 = vmatprep.subr.bf16.mxu0 0
    %1104 = vmatpush2.bf16.msra.mxu0 0
    %1105 = vmatprep.mubr.bf16.mxu0 0
    %1106 = vmatmul.mubr.bf16.gmra.mxu0 %v1068
    %v1107 = vpop.f32.mrf.mxu0
    %v1108 = vadd.f32 0.0, %v1107
    %v1109 = vpop.f32.mrf.mxu0
    %v1110 = vpop.f32.mrf.mxu0
    %v1111 = vpop.f32.mrf.mxu0
    %1112 = vdwg.mxu0
    %1113 = vrot.lane.b32.xlu0 %v262, 40
    %v1114 = vpop.permute.xlu0 %1113
    %v1116 = vsel %vm266, %v1064, 0
    %v1119 = vsel %vm397, %v1114, 0
    %1121 = vmatprep.subr.bf16.mxu0 0
    %1122 = vmatpush1.bf16.msra.mxu0 0
    %1123 = vmatprep.subr.bf16.mxu0 0
    %1124 = vmatpush1.bf16.msra.mxu0 0
    %1125 = vmatprep.subr.bf16.mxu0 0
    %1126 = vmatpush1.bf16.msra.mxu0 0
    %1127 = vmatprep.subr.bf16.mxu0 0
    %1128 = vmatpush1.bf16.msra.mxu0 0
    %1129 = vmatprep.subr.bf16.mxu0 0
    %1130 = vmatpush1.bf16.msra.mxu0 0
    %1131 = vmatprep.subr.bf16.mxu0 0
    %1132 = vmatpush1.bf16.msra.mxu0 0
    %1133 = vmatprep.subr.bf16.mxu0 0
    %1134 = vmatpush1.bf16.msra.mxu0 0
    %1135 = vmatprep.subr.bf16.mxu0 0
    %1136 = vmatpush1.bf16.msra.mxu0 %v1119
    %1137 = vmatprep.subr.bf16.mxu0 0
    %1138 = vmatpush2.bf16.msra.mxu0 0
    %1139 = vmatprep.subr.bf16.mxu0 0
    %1140 = vmatpush2.bf16.msra.mxu0 0
    %1141 = vmatprep.subr.bf16.mxu0 0
    %1142 = vmatpush2.bf16.msra.mxu0 0
    %1143 = vmatprep.subr.bf16.mxu0 0
    %1144 = vmatpush2.bf16.msra.mxu0 0
    %1145 = vmatprep.subr.bf16.mxu0 0
    %1146 = vmatpush2.bf16.msra.mxu0 0
    %1147 = vmatprep.subr.bf16.mxu0 0
    %1148 = vmatpush2.bf16.msra.mxu0 0
    %1149 = vmatprep.subr.bf16.mxu0 0
    %1150 = vmatpush2.bf16.msra.mxu0 0
    %1151 = vmatprep.subr.bf16.mxu0 0
    %1152 = vmatpush2.bf16.msra.mxu0 0
    %1153 = vmatprep.mubr.bf16.mxu0 0
    %1154 = vmatmul.mubr.bf16.gmra.mxu0 %v1116
    %v1155 = vpop.f32.mrf.mxu0
    %v1156 = vadd.f32 0.0, %v1155
    %v1157 = vpop.f32.mrf.mxu0
    %v1158 = vpop.f32.mrf.mxu0
    %v1159 = vpop.f32.mrf.mxu0
    %1160 = vdwg.mxu0
    %1163 = vrot.lane.b32.xlu0 %v660, 8
    %v1164 = vpop.permute.xlu0 %1163
    %1165 = vrot.lane.b32.xlu0 %v708, 8
    %v1166 = vpop.permute.xlu0 %1165
    %1171 = vrot.lane.b32.xlu0 %v884, 16
    %v1172 = vpop.permute.xlu0 %1171
    %1173 = vrot.lane.b32.xlu0 %v932, 16
    %v1174 = vpop.permute.xlu0 %1173
    %1179 = vrot.lane.b32.xlu0 %v1108, 24
    %v1180 = vpop.permute.xlu0 %1179
    %1181 = vrot.lane.b32.xlu0 %v1156, 24
    %v1182 = vpop.permute.xlu0 %1181
    %v1185 = vsel %vm266, %v436, %v1164
    %v1186 = vsel %vm266, %v484, %v1166
    %vm1187 = vcmask 130048
    %v1188 = vsel %vm1187, %v1185, %v1172
    %v1189 = vsel %vm1187, %v1186, %v1174
    %vm1190 = vcmask 195584
    %v1191 = vsel %vm1190, %v1188, %v1180
    %v1192 = vsel %vm1190, %v1189, %v1182
    %v1193 = vpack.c.bf16 %v1192, %v1191
    %v1194 = vld [vmem:[#allocation2] sm:$0xf]
    %v1195 = vld [vmem:[#allocation2 + $0x4] sm:$0xf]
    %v1196 = vld [vmem:[#allocation2 + $0x8] sm:$0xf]
    %v1197 = vld [vmem:[#allocation2 + $0xc] sm:$0xf]
    %v1198 = vld [vmem:[#allocation5] sm:$0x1]
    %v1200 = vlaneseq
    %v1201 = vshrl.u32 %v1200, 7
    %v1202 = vsub.s32 0, %v1201
    %v1203 = vrot.slane %v1198, %v1202
    %v1209 = vunpack.c.l.b16 %v1194
    %v1210 = vunpack.c.l.b16 %v1195
    %v1211 = vunpack.c.l.b16 %v1196
    %v1212 = vunpack.c.l.b16 %v1197
    %v1213 = vpack.c.b16 %v1210, %v1209
    %v1214 = vpack.c.b16 %v1212, %v1211
    %v1218 = vsel %vm213, %v1193, 0
    %1220 = vmatprep.subr.bf16.mxu0 0
    %1221 = vmatpush1.bf16.msra.mxu0 0
    %1222 = vmatprep.subr.bf16.mxu0 0
    %1223 = vmatpush1.bf16.msra.mxu0 0
    %1224 = vmatprep.subr.bf16.mxu0 0
    %1225 = vmatpush1.bf16.msra.mxu0 0
    %1226 = vmatprep.subr.bf16.mxu0 0
    %1227 = vmatpush1.bf16.msra.mxu0 0
    %1228 = vmatprep.subr.bf16.mxu0 0
    %1229 = vmatpush1.bf16.msra.mxu0 0
    %1230 = vmatprep.subr.bf16.mxu0 0
    %1231 = vmatpush1.bf16.msra.mxu0 0
    %1232 = vmatprep.subr.bf16.mxu0 0
    %1233 = vmatpush1.bf16.msra.mxu0 %v1214
    %1234 = vmatprep.subr.bf16.mxu0 0
    %1235 = vmatpush1.bf16.msra.mxu0 %v1213
    %1236 = vmatprep.subr.bf16.mxu0 0
    %1237 = vmatpush2.bf16.msra.mxu0 0
    %1238 = vmatprep.subr.bf16.mxu0 0
    %1239 = vmatpush2.bf16.msra.mxu0 0
    %1240 = vmatprep.subr.bf16.mxu0 0
    %1241 = vmatpush2.bf16.msra.mxu0 0
    %1242 = vmatprep.subr.bf16.mxu0 0
    %1243 = vmatpush2.bf16.msra.mxu0 0
    %1244 = vmatprep.subr.bf16.mxu0 0
    %1245 = vmatpush2.bf16.msra.mxu0 0
    %1246 = vmatprep.subr.bf16.mxu0 0
    %1247 = vmatpush2.bf16.msra.mxu0 0
    %1248 = vmatprep.subr.bf16.mxu0 0
    %1249 = vmatpush2.bf16.msra.mxu0 0
    %1250 = vmatprep.subr.bf16.mxu0 0
    %1251 = vmatpush2.bf16.msra.mxu0 0
    %1252 = vmatprep.mubr.bf16.mxu0 0
    %1253 = vmatmul.mubr.bf16.gmra.mxu0 %v1218
    %v1254 = vpop.f32.mrf.mxu0
    %v1255 = vadd.f32 %v1203, %v1254
    %v1256 = vpop.f32.mrf.mxu0
    %v1257 = vpop.f32.mrf.mxu0
    %v1258 = vadd.f32 %v1203, %v1257
    %v1259 = vpop.f32.mrf.mxu0
    %1260 = vdwg.mxu0
    %v1261 = vmax.f32 %v1255, 0.0
    %v1262 = vmax.f32 %v1258, 0.0
    %v1263 = vpack.c.bf16 %v1262, %v1261
    %v1264 = vld [vmem:[%s6] sm:$0xf]
    %v1265 = vld [vmem:[%s6 + $0x4] sm:$0xf]
    %v1266 = vld [vmem:[%s6 + $0x8] sm:$0xf]
    %v1267 = vld [vmem:[%s6 + $0xc] sm:$0xf]
    %v1268 = vld [vmem:[%s6 + $0x10] sm:$0xf]
    %v1269 = vld [vmem:[%s6 + $0x14] sm:$0xf]
    %v1270 = vld [vmem:[%s6 + $0x18] sm:$0xf]
    %v1271 = vld [vmem:[%s6 + $0x1c] sm:$0xf]
    %v1272 = vld [vmem:[%s6 + $0x20] sm:$0xf]
    %v1273 = vld [vmem:[%s6 + $0x24] sm:$0xf]
    %v1274 = vld [vmem:[%s6 + $0x28] sm:$0xf]
    %v1275 = vld [vmem:[%s6 + $0x2c] sm:$0xf]
    %v1276 = vld [vmem:[%s6 + $0x30] sm:$0xf]
    %v1277 = vld [vmem:[%s6 + $0x34] sm:$0xf]
    %v1278 = vld [vmem:[%s6 + $0x38] sm:$0xf]
    %v1279 = vld [vmem:[%s6 + $0x3c] sm:$0xf]
    %v1280 = vld [vmem:[%s7] sm:$0x1]
    %v1282 = vlaneseq
    %v1283 = vshrl.u32 %v1282, 7
    %v1284 = vsub.s32 0, %v1283
    %v1285 = vrot.slane %v1280, %v1284
    %v1303 = vunpack.c.l.b16 %v1264
    %v1304 = vunpack.c.l.b16 %v1265
    %v1305 = vunpack.c.l.b16 %v1266
    %v1306 = vunpack.c.l.b16 %v1267
    %v1307 = vunpack.c.l.b16 %v1268
    %v1308 = vunpack.c.l.b16 %v1269
    %v1309 = vunpack.c.l.b16 %v1270
    %v1310 = vunpack.c.l.b16 %v1271
    %v1311 = vunpack.c.l.b16 %v1272
    %v1312 = vunpack.c.l.b16 %v1273
    %v1313 = vunpack.c.l.b16 %v1274
    %v1314 = vunpack.c.l.b16 %v1275
    %v1315 = vunpack.c.l.b16 %v1276
    %v1316 = vunpack.c.l.b16 %v1277
    %v1317 = vunpack.c.l.b16 %v1278
    %v1318 = vunpack.c.l.b16 %v1279
    %v1319 = vpack.c.b16 %v1304, %v1303
    %v1320 = vpack.c.b16 %v1306, %v1305
    %v1321 = vpack.c.b16 %v1308, %v1307
    %v1322 = vpack.c.b16 %v1310, %v1309
    %v1323 = vpack.c.b16 %v1312, %v1311
    %v1324 = vpack.c.b16 %v1314, %v1313
    %v1325 = vpack.c.b16 %v1316, %v1315
    %v1326 = vpack.c.b16 %v1318, %v1317
    %1335 = vmatprep.subr.bf16.mxu0 0
    %1336 = vmatpush1.bf16.msra.mxu0 %v1326
    %1337 = vmatprep.subr.bf16.mxu0 0
    %1338 = vmatpush1.bf16.msra.mxu0 %v1325
    %1339 = vmatprep.subr.bf16.mxu0 0
    %1340 = vmatpush1.bf16.msra.mxu0 %v1324
    %1341 = vmatprep.subr.bf16.mxu0 0
    %1342 = vmatpush1.bf16.msra.mxu0 %v1323
    %1343 = vmatprep.subr.bf16.mxu0 0
    %1344 = vmatpush1.bf16.msra.mxu0 %v1322
    %1345 = vmatprep.subr.bf16.mxu0 0
    %1346 = vmatpush1.bf16.msra.mxu0 %v1321
    %1347 = vmatprep.subr.bf16.mxu0 0
    %1348 = vmatpush1.bf16.msra.mxu0 %v1320
    %1349 = vmatprep.subr.bf16.mxu0 0
    %1350 = vmatpush1.bf16.msra.mxu0 %v1319
    %1351 = vmatprep.subr.bf16.mxu0 0
    %1352 = vmatpush2.bf16.msra.mxu0 0
    %1353 = vmatprep.subr.bf16.mxu0 0
    %1354 = vmatpush2.bf16.msra.mxu0 0
    %1355 = vmatprep.subr.bf16.mxu0 0
    %1356 = vmatpush2.bf16.msra.mxu0 0
    %1357 = vmatprep.subr.bf16.mxu0 0
    %1358 = vmatpush2.bf16.msra.mxu0 0
    %1359 = vmatprep.subr.bf16.mxu0 0
    %1360 = vmatpush2.bf16.msra.mxu0 0
    %1361 = vmatprep.subr.bf16.mxu0 0
    %1362 = vmatpush2.bf16.msra.mxu0 0
    %1363 = vmatprep.subr.bf16.mxu0 0
    %1364 = vmatpush2.bf16.msra.mxu0 0
    %1365 = vmatprep.subr.bf16.mxu0 0
    %1366 = vmatpush2.bf16.msra.mxu0 0
    %1367 = vmatprep.mubr.bf16.mxu0 0
    %1368 = vmatmul.mubr.bf16.gmra.mxu0 %v1263
    %v1369 = vpop.f32.mrf.mxu0
    %v1370 = vadd.f32 %v1285, %v1369
    %v1371 = vpop.f32.mrf.mxu0
    %v1372 = vpop.f32.mrf.mxu0
    %v1373 = vadd.f32 %v1285, %v1372
    %v1374 = vpop.f32.mrf.mxu0
    %1375 = vdwg.mxu0
    %1376 = vst [vmem:[#allocation7] sm:$0xff] %v1370
    %1377 = vst [vmem:[#allocation7 + $0x8] sm:$0xff] %v1373
    // Predicated region
    $region42: #{tpu_custom_call.1} parent=1 // pred_check
      _
    $region43: #{tpu_custom_call.1} parent=1 // pred_check_branch
      %1379 = sbr.rel (0) target = $region45
    $region44: #{tpu_custom_call.1} parent=1 // pred_region
      %s1381 = ssub.s32 256, 256
      %1382 = vsyncadd [#allocation4], %s1381
      %s1383 = sshll.u32 [#allocation7], 4
      %s1384 = int_to_ptr.vmem [resolvable:$true] %s1383
      %1389 = dma.vmem_to_hbm [thread:$0]  %s1384, 256, %s8, [#allocation4], 128, 128, 8
    $region45: #{tpu_custom_call.1} parent=1 // pred_fallthru
      _
    // Predicated region
    $region46: #{tpu_custom_call.1} parent=1 // pred_check
      _
    $region47: #{tpu_custom_call.1} parent=1 // pred_check_branch
      %1391 = sbr.rel (0) target = $region49
    $region48: #{tpu_custom_call.1} parent=1 // pred_region
      %1392 = dma.done [#allocation4], 256
    $region49: #{tpu_custom_call.1} parent=1 // pred_fallthru
      _
    %1393 = vsyncpa [#allocation3], 1
    %1394 = vsyncpa [#allocation6], 1
    %1395 = vsyncpa [#allocation4], 1

</llo_original>
